<compile_context>
chip_gen: v5e
topology: v5e:2x2
jax: 0.10.0
libtpu: 0.0.40
codegen_flags: <defaults>
</compile_context>

<pallas_src>
import functools

import jax
import jax.numpy as jnp
import numpy as np
from jax.experimental import pallas as pl
from jax.experimental.pallas import tpu as pltpu


# ----------------------------- math helpers ------------------------------- #
def _erf(x):
    # Abramowitz & Stegun 7.1.26, |error| <= 1.5e-7 (float32-exact).
    a1, a2, a3, a4, a5 = 0.254829592, -0.284496736, 1.421413741, -1.453152027, 1.061405429
    p = 0.3275911
    ax = jnp.abs(x)
    t = 1.0 / (1.0 + p * ax)
    poly = ((((a5 * t + a4) * t + a3) * t + a2) * t + a1) * t
    y = 1.0 - poly * jnp.exp(-ax * ax)
    return jnp.where(x >= 0.0, y, -y)


def _gelu(x):
    # Exact GELU (PyTorch nn.GELU() default, approximate='none').
    return 0.5 * x * (1.0 + _erf(x * np.float32(1.0 / np.sqrt(2.0))))


# ------------------------------ Pallas kernel ------------------------------ #
def mlpmixer_kernel(
    x_ref,                                    # (Bt*F, W)   batch tile, batch folded into rows
    w_emb_ref, b_emb_ref,                     # (W, H), (1, H)
    tm_w1_ref, tm_b1_ref, tm_w2c_ref, tm_b2c_ref,   # time mixer  (L,H,2H),(L,1,2H),(L,2H,2H),(L,1,2H)
    fm_w1_ref, fm_b1_ref, fm_w2c_ref, fm_b2c_ref,   # feat mixer  (L,F,2F),(L,1,2F),(L,2F,2F),(L,1,2F)
    w_out_ref, b_out_ref,                     # (H, F), (1, 1)
    o_ref,                                    # (1, 1, Bt)  lane-dense per-tile output row
    *, bt, f_dim, h_dim,
):
    x = x_ref[...].astype(jnp.float32)                              # (Bt*F, W)

    # input_embedding: whole batch tile as one matmul, M = Bt*F
    t = jnp.dot(x, w_emb_ref[...], preferred_element_type=jnp.float32) + b_emb_ref[...]   # (Bt*F, H)

    num_layers = tm_w1_ref.shape[0]
    h = None
    for l in range(num_layers):                                     # static unroll over layers
        # ------------- time mixer on (Bt*F, H) -------------------------- #
        z1 = _gelu(jnp.dot(t, tm_w1_ref[l], preferred_element_type=jnp.float32) + tm_b1_ref[l])
        # fused projection + gate: [z2 | gate_pre] in one matmul (N = 2H)
        zc = jnp.dot(z1, tm_w2c_ref[l], preferred_element_type=jnp.float32) + tm_b2c_ref[l]
        z2 = zc[:, :h_dim]
        g = jax.nn.sigmoid(zc[:, h_dim:])
        t = g * z2 + t                                              # gated attn + residual, (Bt*F, H)

        # layout switch: (Bt, F, H) -> (Bt, H, F)  (single minor-dims transpose)
        ff = jnp.swapaxes(t.reshape(bt, f_dim, h_dim), 1, 2).reshape(bt * h_dim, f_dim)

        # ------------- feature mixer on (Bt*H, F) ------------------------ #
        z1 = _gelu(jnp.dot(ff, fm_w1_ref[l], preferred_element_type=jnp.float32) + fm_b1_ref[l])
        zc = jnp.dot(z1, fm_w2c_ref[l], preferred_element_type=jnp.float32) + fm_b2c_ref[l]
        z2 = zc[:, :f_dim]
        g = jax.nn.sigmoid(zc[:, f_dim:])
        h = g * z2 + ff                                             # (Bt*H, F)

        if l + 1 < num_layers:
            # back to time layout for the next layer
            t = jnp.swapaxes(h.reshape(bt, h_dim, f_dim), 1, 2).reshape(bt * f_dim, h_dim)

    # output head: out[b] = sum_{h,f} h[b,h,f] * W_out[h,f] + b  (flatten order = (H, F))
    h3 = h.reshape(bt, h_dim, f_dim)                                # (Bt, H, F)
    s = jnp.sum(h3 * w_out_ref[...], axis=2)                        # (Bt, H)  lane reduce
    row = jnp.sum(s, axis=1).reshape(1, bt) + b_out_ref[...]        # (1, Bt)  lane-dense result
    o_ref[...] = row.reshape(1, 1, bt).astype(o_ref.dtype)


# ------------------------------ wrapper ------------------------------------ #
def mlpmixer_forward(x, params, *, batch_tile=None):
    B, W, F = x.shape
    H = params["w_emb"].shape[1]

    # ---- pre-compose the gate Linear into the preceding projection -------- #
    # g = sigmoid(z2 @ Wg + gb), z2 = z @ W2 + b2
    #   => [z2 | gate_pre] = z @ [W2 | W2@Wg] + [b2 | b2@Wg + gb]
    def fuse(w2, b2, gw, gb):
        w2g = jnp.einsum("lij,ljk->lik", w2, gw)
        b2g = jnp.einsum("lij,ljk->lik", b2, gw) + gb
        return jnp.concatenate([w2, w2g], axis=-1), jnp.concatenate([b2, b2g], axis=-1)

    tm_w2c, tm_b2c = fuse(params["tm_w2"], params["tm_b2"], params["tm_gw"], params["tm_gb"])
    fm_w2c, fm_b2c = fuse(params["fm_w2"], params["fm_b2"], params["fm_gw"], params["fm_gb"])

    # ---- batch tile sized against VMEM (conservative; fine on v7x 64 MiB) -- #
    if batch_tile is None:
        act_bytes = 4 * (W * F + 12 * F * H)            # rough live-activation bound / element
        batch_tile = max(1, min(B, (8 << 20) // max(act_bytes, 1), 1024))
    Bt = int(min(batch_tile, B))
    if Bt < B:
        while (Bt * F) % 8 != 0 and Bt < B:             # keep row blocks sublane-aligned
            Bt += 1
    nb = -(-B // Bt)
    B_pad = nb * Bt

    # layout plumbing in the wrapper: x (B,W,F) -> (B,F,W) -> (B*F, W) so the
    # kernel sees the embedding as a single big (Bt*F, W) @ (W, H) matmul.
    x_t = jnp.swapaxes(x, 1, 2)                         # (B, F, W)
    if B_pad != B:
        x_t = jnp.concatenate([x_t, jnp.zeros((B_pad - B, F, W), x_t.dtype)], axis=0)
    x2d = x_t.reshape(B_pad * F, W).astype(jnp.float32)

    args = (
        x2d,
        params["w_emb"], params["b_emb"],
        params["tm_w1"], params["tm_b1"], tm_w2c, tm_b2c,
        params["fm_w1"], params["fm_b1"], fm_w2c, fm_b2c,
        params["w_out_hf"], params["b_out"],
    )

    in_specs = [pl.BlockSpec((Bt * F, W), lambda b: (b, 0))]
    for a in args[1:]:                                  # weights: full, VMEM-resident
        in_specs.append(pl.BlockSpec(a.shape, lambda b, n=a.ndim: (0,) * n))

    kernel = functools.partial(mlpmixer_kernel, bt=Bt, f_dim=F, h_dim=H)

    out = pl.pallas_call(
        kernel,
        out_shape=jax.ShapeDtypeStruct((nb, 1, Bt), jnp.float32),
        grid=(nb,),
        in_specs=in_specs,
        out_specs=pl.BlockSpec((1, 1, Bt), lambda b: (b, 0, 0)),
        compiler_params=pltpu.CompilerParams(
            dimension_semantics=("parallel",),          # independent batch tiles (v7x megacore)
            vmem_limit_bytes=32 * 1024 * 1024,
        ),
    )(*args)

    return out.reshape(B_pad, 1)[:B]


# ------------------------- parameter initialization ------------------------ #
def init_params(key, window_size, in_features, hidden_dim, num_layers):
    """Deterministic PyTorch-nn.Linear-style init; weights stored (in, out)."""
    W, F, H, L = window_size, in_features, hidden_dim, num_layers

    def linear(key, fan_in, fan_out):
        k1, k2 = jax.random.split(key)
        bound = 1.0 / np.sqrt(fan_in)
        w = jax.random.uniform(k1, (fan_in, fan_out), jnp.float32, -bound, bound)
        b = jax.random.uniform(k2, (1, fan_out), jnp.float32, -bound, bound)
        return w, b

    keys = jax.random.split(key, 2 + 6 * L)
    ki = iter(keys)

    p = {}
    p["w_emb"], p["b_emb"] = linear(next(ki), W, H)

    def stack_layers(make):
        ws, bs = [], []
        for _ in range(L):
            w, b = make(next(ki))
            ws.append(w)
            bs.append(b)
        return jnp.stack(ws), jnp.stack(bs)

    # time mixer: Linear(H -> 2H), Linear(2H -> H), gate Linear(H -> H)
    p["tm_w1"], p["tm_b1"] = stack_layers(lambda k: linear(k, H, 2 * H))
    p["tm_w2"], p["tm_b2"] = stack_layers(lambda k: linear(k, 2 * H, H))
    p["tm_gw"], p["tm_gb"] = stack_layers(lambda k: linear(k, H, H))
    # feature mixer: Linear(F -> 2F), Linear(2F -> F), gate Linear(F -> F)
    p["fm_w1"], p["fm_b1"] = stack_layers(lambda k: linear(k, F, 2 * F))
    p["fm_w2"], p["fm_b2"] = stack_layers(lambda k: linear(k, 2 * F, F))
    p["fm_gw"], p["fm_gb"] = stack_layers(lambda k: linear(k, F, F))

    # output head: Linear(F*H -> 1); reshape to (H, F) matching flatten order of (H, F).
    w_out, b_out = linear(next(ki), F * H, 1)
    p["w_out_hf"] = w_out[:, 0].reshape(H, F)
    p["b_out"] = b_out.reshape(1, 1)
    return p


# --------------------------- pure-JAX reference ---------------------------- #
def ref_forward(x, p):
    def gelu_exact(v):
        return 0.5 * v * (1.0 + jax.scipy.special.erf(v / jnp.sqrt(2.0).astype(v.dtype)))

    emb = jnp.einsum("bwf,wh->bfh", x, p["w_emb"]) + p["b_emb"]      # (B, F, H)
    t = emb
    h = None
    L = p["tm_w1"].shape[0]
    for l in range(L):
        z = gelu_exact(t @ p["tm_w1"][l] + p["tm_b1"][l])
        z = z @ p["tm_w2"][l] + p["tm_b2"][l]
        g = jax.nn.sigmoid(z @ p["tm_gw"][l] + p["tm_gb"][l])
        t = g * z + t                                                # (B, F, H)
        ff = jnp.swapaxes(t, -1, -2)                                 # (B, H, F)
        z = gelu_exact(ff @ p["fm_w1"][l] + p["fm_b1"][l])
        z = z @ p["fm_w2"][l] + p["fm_b2"][l]
        g = jax.nn.sigmoid(z @ p["fm_gw"][l] + p["fm_gb"][l])
        h = g * z + ff                                               # (B, H, F)
        t = jnp.swapaxes(h, -1, -2)
    flat = h.reshape(h.shape[0], -1)                                 # (B, H*F)
    return flat @ p["w_out_hf"].reshape(-1, 1) + p["b_out"]          # (B, 1)


# ---------------------------------- main ----------------------------------- #
if __name__ == "__main__":
    # Small shapes consistent with the module's forward.
    B, W, F, H, L = 2, 16, 8, 32, 2   # batch, window_size, in_features, hidden_dim, num_layers

    key = jax.random.PRNGKey(0)
    kx, kp = jax.random.split(key)
    x = jax.random.normal(kx, (B, W, F), dtype=jnp.float32)
    params = init_params(kp, W, F, H, L)

    # TODO(synk): the 4-D contrastive branch (generate_contrastive_samples /
    # pn_rul_compute) depends on an undefined base class and is not implemented.

    out = mlpmixer_forward(x, params)
    out = jax.block_until_ready(out)

    ref = ref_forward(x, params)
    np.testing.assert_allclose(np.asarray(out), np.asarray(ref), rtol=1e-3, atol=1e-3)

    print("KERNEL_OK")
</pallas_src>

<mosaic_0001>
module attributes {stable_mosaic.version = 11 : i64} {
  func.func @mlpmixer_kernel(%arg0: i32, %arg1: memref<16x16xf32, #tpu.memory_space<vmem>>, %arg2: memref<16x32xf32, #tpu.memory_space<vmem>>, %arg3: memref<1x32xf32, #tpu.memory_space<vmem>>, %arg4: memref<2x32x64xf32, #tpu.memory_space<vmem>>, %arg5: memref<2x1x64xf32, #tpu.memory_space<vmem>>, %arg6: memref<2x64x64xf32, #tpu.memory_space<vmem>>, %arg7: memref<2x1x64xf32, #tpu.memory_space<vmem>>, %arg8: memref<2x8x16xf32, #tpu.memory_space<vmem>>, %arg9: memref<2x1x16xf32, #tpu.memory_space<vmem>>, %arg10: memref<2x16x16xf32, #tpu.memory_space<vmem>>, %arg11: memref<2x1x16xf32, #tpu.memory_space<vmem>>, %arg12: memref<32x8xf32, #tpu.memory_space<vmem>>, %arg13: memref<1x1xf32, #tpu.memory_space<vmem>>, %arg14: memref<1x1x2xf32, #tpu.memory_space<vmem>>) attributes {dimension_semantics = [#tpu.dimension_semantics<parallel>], iteration_bounds = array<i64: 1>, scalar_prefetch = 0 : i64, scratch_operands = 0 : i64, tpu.core_type = #tpu.core_type<tc>, window_params = [{transform_indices = @transform_0, window_bounds = array<i64: 16, 16>}, {pipeline_mode = #tpu.pipeline_mode<synchronous>, transform_indices = @transform_1, window_bounds = array<i64: 16, 32>}, {pipeline_mode = #tpu.pipeline_mode<synchronous>, transform_indices = @transform_2, window_bounds = array<i64: 1, 32>}, {pipeline_mode = #tpu.pipeline_mode<synchronous>, transform_indices = @transform_3, window_bounds = array<i64: 2, 32, 64>}, {pipeline_mode = #tpu.pipeline_mode<synchronous>, transform_indices = @transform_4, window_bounds = array<i64: 2, 1, 64>}, {pipeline_mode = #tpu.pipeline_mode<synchronous>, transform_indices = @transform_5, window_bounds = array<i64: 2, 64, 64>}, {pipeline_mode = #tpu.pipeline_mode<synchronous>, transform_indices = @transform_6, window_bounds = array<i64: 2, 1, 64>}, {pipeline_mode = #tpu.pipeline_mode<synchronous>, transform_indices = @transform_7, window_bounds = array<i64: 2, 8, 16>}, {pipeline_mode = #tpu.pipeline_mode<synchronous>, transform_indices = @transform_8, window_bounds = array<i64: 2, 1, 16>}, {pipeline_mode = #tpu.pipeline_mode<synchronous>, transform_indices = @transform_9, window_bounds = array<i64: 2, 16, 16>}, {pipeline_mode = #tpu.pipeline_mode<synchronous>, transform_indices = @transform_10, window_bounds = array<i64: 2, 1, 16>}, {pipeline_mode = #tpu.pipeline_mode<synchronous>, transform_indices = @transform_11, window_bounds = array<i64: 32, 8>}, {pipeline_mode = #tpu.pipeline_mode<synchronous>, transform_indices = @transform_12, window_bounds = array<i64: 1, 1>}, {transform_indices = @transform_13, window_bounds = array<i64: 1, 1, 2>}]} {
    %c0 = arith.constant 0 : index
    %c0_0 = arith.constant 0 : index
    %0 = vector.load %arg1[%c0, %c0_0] : memref<16x16xf32, #tpu.memory_space<vmem>>, vector<16x16xf32>
    %c0_1 = arith.constant 0 : index
    %c0_2 = arith.constant 0 : index
    %1 = vector.load %arg2[%c0_1, %c0_2] : memref<16x32xf32, #tpu.memory_space<vmem>>, vector<16x32xf32>
    %cst = arith.constant dense<0.000000e+00> : vector<16x32xf32>
    %2 = tpu.matmul %0, %1, %cst {dimension_numbers = #tpu.dot_dimension_numbers<[1], [0], [0], [1], [0, 0, 1, 1], [], []>} : vector<16x16xf32>, vector<16x32xf32>, vector<16x32xf32> -> vector<16x32xf32>
    %c0_3 = arith.constant 0 : index
    %c0_4 = arith.constant 0 : index
    %3 = vector.load %arg3[%c0_3, %c0_4] : memref<1x32xf32, #tpu.memory_space<vmem>>, vector<1x32xf32>
    %4 = vector.broadcast %3 : vector<1x32xf32> to vector<16x32xf32>
    %5 = arith.addf %2, %4 : vector<16x32xf32>
    %c0_5 = arith.constant 0 : index
    %c0_6 = arith.constant 0 : index
    %c0_7 = arith.constant 0 : index
    %6 = vector.load %arg4[%c0_5, %c0_6, %c0_7] : memref<2x32x64xf32, #tpu.memory_space<vmem>>, vector<1x32x64xf32>
    %7 = vector.shape_cast %6 : vector<1x32x64xf32> to vector<32x64xf32>
    %cst_8 = arith.constant dense<0.000000e+00> : vector<16x64xf32>
    %8 = tpu.matmul %5, %7, %cst_8 {dimension_numbers = #tpu.dot_dimension_numbers<[1], [0], [0], [1], [0, 0, 1, 1], [], []>} : vector<16x32xf32>, vector<32x64xf32>, vector<16x64xf32> -> vector<16x64xf32>
    %c0_9 = arith.constant 0 : index
    %c0_10 = arith.constant 0 : index
    %c0_11 = arith.constant 0 : index
    %9 = vector.load %arg5[%c0_9, %c0_10, %c0_11] : memref<2x1x64xf32, #tpu.memory_space<vmem>>, vector<1x1x64xf32>
    %10 = vector.shape_cast %9 : vector<1x1x64xf32> to vector<1x64xf32>
    %11 = vector.broadcast %10 : vector<1x64xf32> to vector<16x64xf32>
    %12 = arith.addf %8, %11 : vector<16x64xf32>
    %cst_12 = arith.constant 5.000000e-01 : f32
    %13 = vector.broadcast %cst_12 : f32 to vector<16x64xf32>
    %14 = arith.mulf %13, %12 : vector<16x64xf32>
    %cst_13 = arith.constant 0.707106769 : f32
    %15 = vector.broadcast %cst_13 : f32 to vector<16x64xf32>
    %16 = arith.mulf %12, %15 : vector<16x64xf32>
    %17 = math.absf %16 : vector<16x64xf32>
    %cst_14 = arith.constant 0.327591091 : f32
    %18 = vector.broadcast %cst_14 : f32 to vector<16x64xf32>
    %19 = arith.mulf %18, %17 : vector<16x64xf32>
    %cst_15 = arith.constant 1.000000e+00 : f32
    %20 = vector.broadcast %cst_15 : f32 to vector<16x64xf32>
    %21 = arith.addf %20, %19 : vector<16x64xf32>
    %cst_16 = arith.constant 1.000000e+00 : f32
    %22 = vector.broadcast %cst_16 : f32 to vector<16x64xf32>
    %23 = arith.divf %22, %21 : vector<16x64xf32>
    %cst_17 = arith.constant 1.06140542 : f32
    %24 = vector.broadcast %cst_17 : f32 to vector<16x64xf32>
    %25 = arith.mulf %24, %23 : vector<16x64xf32>
    %cst_18 = arith.constant -1.45315206 : f32
    %26 = vector.broadcast %cst_18 : f32 to vector<16x64xf32>
    %27 = arith.addf %25, %26 : vector<16x64xf32>
    %28 = arith.mulf %27, %23 : vector<16x64xf32>
    %cst_19 = arith.constant 1.42141378 : f32
    %29 = vector.broadcast %cst_19 : f32 to vector<16x64xf32>
    %30 = arith.addf %28, %29 : vector<16x64xf32>
    %31 = arith.mulf %30, %23 : vector<16x64xf32>
    %cst_20 = arith.constant -0.284496725 : f32
    %32 = vector.broadcast %cst_20 : f32 to vector<16x64xf32>
    %33 = arith.addf %31, %32 : vector<16x64xf32>
    %34 = arith.mulf %33, %23 : vector<16x64xf32>
    %cst_21 = arith.constant 0.254829586 : f32
    %35 = vector.broadcast %cst_21 : f32 to vector<16x64xf32>
    %36 = arith.addf %34, %35 : vector<16x64xf32>
    %37 = arith.mulf %36, %23 : vector<16x64xf32>
    %cst_22 = arith.constant 0.000000e+00 : f32
    %38 = vector.broadcast %cst_22 : f32 to vector<16x64xf32>
    %39 = arith.subf %38, %17 : vector<16x64xf32>
    %40 = arith.mulf %39, %17 : vector<16x64xf32>
    %41 = math.exp %40 : vector<16x64xf32>
    %42 = arith.mulf %37, %41 : vector<16x64xf32>
    %cst_23 = arith.constant 1.000000e+00 : f32
    %43 = vector.broadcast %cst_23 : f32 to vector<16x64xf32>
    %44 = arith.subf %43, %42 : vector<16x64xf32>
    %cst_24 = arith.constant 0.000000e+00 : f32
    %45 = vector.broadcast %cst_24 : f32 to vector<16x64xf32>
    %46 = arith.cmpf oge, %16, %45 : vector<16x64xf32>
    %cst_25 = arith.constant 0.000000e+00 : f32
    %47 = vector.broadcast %cst_25 : f32 to vector<16x64xf32>
    %48 = arith.subf %47, %44 : vector<16x64xf32>
    %49 = arith.select %46, %44, %48 : vector<16x64xi1>, vector<16x64xf32>
    %cst_26 = arith.constant 1.000000e+00 : f32
    %50 = vector.broadcast %cst_26 : f32 to vector<16x64xf32>
    %51 = arith.addf %50, %49 : vector<16x64xf32>
    %52 = arith.mulf %14, %51 : vector<16x64xf32>
    %c0_27 = arith.constant 0 : index
    %c0_28 = arith.constant 0 : index
    %c0_29 = arith.constant 0 : index
    %53 = vector.load %arg6[%c0_27, %c0_28, %c0_29] : memref<2x64x64xf32, #tpu.memory_space<vmem>>, vector<1x64x64xf32>
    %54 = vector.shape_cast %53 : vector<1x64x64xf32> to vector<64x64xf32>
    %cst_30 = arith.constant dense<0.000000e+00> : vector<16x64xf32>
    %55 = tpu.matmul %52, %54, %cst_30 {dimension_numbers = #tpu.dot_dimension_numbers<[1], [0], [0], [1], [0, 0, 1, 1], [], []>} : vector<16x64xf32>, vector<64x64xf32>, vector<16x64xf32> -> vector<16x64xf32>
    %c0_31 = arith.constant 0 : index
    %c0_32 = arith.constant 0 : index
    %c0_33 = arith.constant 0 : index
    %56 = vector.load %arg7[%c0_31, %c0_32, %c0_33] : memref<2x1x64xf32, #tpu.memory_space<vmem>>, vector<1x1x64xf32>
    %57 = vector.shape_cast %56 : vector<1x1x64xf32> to vector<1x64xf32>
    %58 = vector.broadcast %57 : vector<1x64xf32> to vector<16x64xf32>
    %59 = arith.addf %55, %58 : vector<16x64xf32>
    %60 = vector.extract_strided_slice %59 {offsets = [0, 0], sizes = [16, 32], strides = [1, 1]} : vector<16x64xf32> to vector<16x32xf32>
    %61 = vector.extract_strided_slice %59 {offsets = [0, 32], sizes = [16, 32], strides = [1, 1]} : vector<16x64xf32> to vector<16x32xf32>
    %62 = arith.negf %61 : vector<16x32xf32>
    %63 = math.exp %62 : vector<16x32xf32>
    %cst_34 = arith.constant 1.000000e+00 : f32
    %64 = vector.broadcast %cst_34 : f32 to vector<16x32xf32>
    %65 = arith.addf %64, %63 : vector<16x32xf32>
    %66 = arith.divf %64, %65 : vector<16x32xf32>
    %67 = arith.mulf %66, %60 : vector<16x32xf32>
    %68 = arith.addf %67, %5 : vector<16x32xf32>
    %69 = vector.shape_cast %68 : vector<16x32xf32> to vector<2x8x32xf32>
    %70 = tpu.transpose %69, [0, 2, 1] : vector<2x8x32xf32> -> vector<2x32x8xf32>
    %71 = vector.shape_cast %70 : vector<2x32x8xf32> to vector<64x8xf32>
    %c0_35 = arith.constant 0 : index
    %c0_36 = arith.constant 0 : index
    %c0_37 = arith.constant 0 : index
    %72 = vector.load %arg8[%c0_35, %c0_36, %c0_37] : memref<2x8x16xf32, #tpu.memory_space<vmem>>, vector<1x8x16xf32>
    %73 = vector.shape_cast %72 : vector<1x8x16xf32> to vector<8x16xf32>
    %cst_38 = arith.constant dense<0.000000e+00> : vector<64x16xf32>
    %74 = tpu.matmul %71, %73, %cst_38 {dimension_numbers = #tpu.dot_dimension_numbers<[1], [0], [0], [1], [0, 0, 1, 1], [], []>} : vector<64x8xf32>, vector<8x16xf32>, vector<64x16xf32> -> vector<64x16xf32>
    %c0_39 = arith.constant 0 : index
    %c0_40 = arith.constant 0 : index
    %c0_41 = arith.constant 0 : index
    %75 = vector.load %arg9[%c0_39, %c0_40, %c0_41] : memref<2x1x16xf32, #tpu.memory_space<vmem>>, vector<1x1x16xf32>
    %76 = vector.shape_cast %75 : vector<1x1x16xf32> to vector<1x16xf32>
    %77 = vector.broadcast %76 : vector<1x16xf32> to vector<64x16xf32>
    %78 = arith.addf %74, %77 : vector<64x16xf32>
    %cst_42 = arith.constant 5.000000e-01 : f32
    %79 = vector.broadcast %cst_42 : f32 to vector<64x16xf32>
    %80 = arith.mulf %79, %78 : vector<64x16xf32>
    %cst_43 = arith.constant 0.707106769 : f32
    %81 = vector.broadcast %cst_43 : f32 to vector<64x16xf32>
    %82 = arith.mulf %78, %81 : vector<64x16xf32>
    %83 = math.absf %82 : vector<64x16xf32>
    %cst_44 = arith.constant 0.327591091 : f32
    %84 = vector.broadcast %cst_44 : f32 to vector<64x16xf32>
    %85 = arith.mulf %84, %83 : vector<64x16xf32>
    %cst_45 = arith.constant 1.000000e+00 : f32
    %86 = vector.broadcast %cst_45 : f32 to vector<64x16xf32>
    %87 = arith.addf %86, %85 : vector<64x16xf32>
    %cst_46 = arith.constant 1.000000e+00 : f32
    %88 = vector.broadcast %cst_46 : f32 to vector<64x16xf32>
    %89 = arith.divf %88, %87 : vector<64x16xf32>
    %cst_47 = arith.constant 1.06140542 : f32
    %90 = vector.broadcast %cst_47 : f32 to vector<64x16xf32>
    %91 = arith.mulf %90, %89 : vector<64x16xf32>
    %cst_48 = arith.constant -1.45315206 : f32
    %92 = vector.broadcast %cst_48 : f32 to vector<64x16xf32>
    %93 = arith.addf %91, %92 : vector<64x16xf32>
    %94 = arith.mulf %93, %89 : vector<64x16xf32>
    %cst_49 = arith.constant 1.42141378 : f32
    %95 = vector.broadcast %cst_49 : f32 to vector<64x16xf32>
    %96 = arith.addf %94, %95 : vector<64x16xf32>
    %97 = arith.mulf %96, %89 : vector<64x16xf32>
    %cst_50 = arith.constant -0.284496725 : f32
    %98 = vector.broadcast %cst_50 : f32 to vector<64x16xf32>
    %99 = arith.addf %97, %98 : vector<64x16xf32>
    %100 = arith.mulf %99, %89 : vector<64x16xf32>
    %cst_51 = arith.constant 0.254829586 : f32
    %101 = vector.broadcast %cst_51 : f32 to vector<64x16xf32>
    %102 = arith.addf %100, %101 : vector<64x16xf32>
    %103 = arith.mulf %102, %89 : vector<64x16xf32>
    %cst_52 = arith.constant 0.000000e+00 : f32
    %104 = vector.broadcast %cst_52 : f32 to vector<64x16xf32>
    %105 = arith.subf %104, %83 : vector<64x16xf32>
    %106 = arith.mulf %105, %83 : vector<64x16xf32>
    %107 = math.exp %106 : vector<64x16xf32>
    %108 = arith.mulf %103, %107 : vector<64x16xf32>
    %cst_53 = arith.constant 1.000000e+00 : f32
    %109 = vector.broadcast %cst_53 : f32 to vector<64x16xf32>
    %110 = arith.subf %109, %108 : vector<64x16xf32>
    %cst_54 = arith.constant 0.000000e+00 : f32
    %111 = vector.broadcast %cst_54 : f32 to vector<64x16xf32>
    %112 = arith.cmpf oge, %82, %111 : vector<64x16xf32>
    %cst_55 = arith.constant 0.000000e+00 : f32
    %113 = vector.broadcast %cst_55 : f32 to vector<64x16xf32>
    %114 = arith.subf %113, %110 : vector<64x16xf32>
    %115 = arith.select %112, %110, %114 : vector<64x16xi1>, vector<64x16xf32>
    %cst_56 = arith.constant 1.000000e+00 : f32
    %116 = vector.broadcast %cst_56 : f32 to vector<64x16xf32>
    %117 = arith.addf %116, %115 : vector<64x16xf32>
    %118 = arith.mulf %80, %117 : vector<64x16xf32>
    %c0_57 = arith.constant 0 : index
    %c0_58 = arith.constant 0 : index
    %c0_59 = arith.constant 0 : index
    %119 = vector.load %arg10[%c0_57, %c0_58, %c0_59] : memref<2x16x16xf32, #tpu.memory_space<vmem>>, vector<1x16x16xf32>
    %120 = vector.shape_cast %119 : vector<1x16x16xf32> to vector<16x16xf32>
    %cst_60 = arith.constant dense<0.000000e+00> : vector<64x16xf32>
    %121 = tpu.matmul %118, %120, %cst_60 {dimension_numbers = #tpu.dot_dimension_numbers<[1], [0], [0], [1], [0, 0, 1, 1], [], []>} : vector<64x16xf32>, vector<16x16xf32>, vector<64x16xf32> -> vector<64x16xf32>
    %c0_61 = arith.constant 0 : index
    %c0_62 = arith.constant 0 : index
    %c0_63 = arith.constant 0 : index
    %122 = vector.load %arg11[%c0_61, %c0_62, %c0_63] : memref<2x1x16xf32, #tpu.memory_space<vmem>>, vector<1x1x16xf32>
    %123 = vector.shape_cast %122 : vector<1x1x16xf32> to vector<1x16xf32>
    %124 = vector.broadcast %123 : vector<1x16xf32> to vector<64x16xf32>
    %125 = arith.addf %121, %124 : vector<64x16xf32>
    %126 = vector.extract_strided_slice %125 {offsets = [0, 0], sizes = [64, 8], strides = [1, 1]} : vector<64x16xf32> to vector<64x8xf32>
    %127 = vector.extract_strided_slice %125 {offsets = [0, 8], sizes = [64, 8], strides = [1, 1]} : vector<64x16xf32> to vector<64x8xf32>
    %128 = arith.negf %127 : vector<64x8xf32>
    %129 = math.exp %128 : vector<64x8xf32>
    %cst_64 = arith.constant 1.000000e+00 : f32
    %130 = vector.broadcast %cst_64 : f32 to vector<64x8xf32>
    %131 = arith.addf %130, %129 : vector<64x8xf32>
    %132 = arith.divf %130, %131 : vector<64x8xf32>
    %133 = arith.mulf %132, %126 : vector<64x8xf32>
    %134 = arith.addf %133, %71 : vector<64x8xf32>
    %135 = vector.shape_cast %134 : vector<64x8xf32> to vector<2x32x8xf32>
    %136 = tpu.transpose %135, [0, 2, 1] : vector<2x32x8xf32> -> vector<2x8x32xf32>
    %137 = vector.shape_cast %136 : vector<2x8x32xf32> to vector<16x32xf32>
    %c1 = arith.constant 1 : index
    %c0_65 = arith.constant 0 : index
    %c0_66 = arith.constant 0 : index
    %138 = vector.load %arg4[%c1, %c0_65, %c0_66] : memref<2x32x64xf32, #tpu.memory_space<vmem>>, vector<1x32x64xf32>
    %139 = vector.shape_cast %138 : vector<1x32x64xf32> to vector<32x64xf32>
    %cst_67 = arith.constant dense<0.000000e+00> : vector<16x64xf32>
    %140 = tpu.matmul %137, %139, %cst_67 {dimension_numbers = #tpu.dot_dimension_numbers<[1], [0], [0], [1], [0, 0, 1, 1], [], []>} : vector<16x32xf32>, vector<32x64xf32>, vector<16x64xf32> -> vector<16x64xf32>
    %c1_68 = arith.constant 1 : index
    %c0_69 = arith.constant 0 : index
    %c0_70 = arith.constant 0 : index
    %141 = vector.load %arg5[%c1_68, %c0_69, %c0_70] : memref<2x1x64xf32, #tpu.memory_space<vmem>>, vector<1x1x64xf32>
    %142 = vector.shape_cast %141 : vector<1x1x64xf32> to vector<1x64xf32>
    %143 = vector.broadcast %142 : vector<1x64xf32> to vector<16x64xf32>
    %144 = arith.addf %140, %143 : vector<16x64xf32>
    %cst_71 = arith.constant 5.000000e-01 : f32
    %145 = vector.broadcast %cst_71 : f32 to vector<16x64xf32>
    %146 = arith.mulf %145, %144 : vector<16x64xf32>
    %cst_72 = arith.constant 0.707106769 : f32
    %147 = vector.broadcast %cst_72 : f32 to vector<16x64xf32>
    %148 = arith.mulf %144, %147 : vector<16x64xf32>
    %149 = math.absf %148 : vector<16x64xf32>
    %cst_73 = arith.constant 0.327591091 : f32
    %150 = vector.broadcast %cst_73 : f32 to vector<16x64xf32>
    %151 = arith.mulf %150, %149 : vector<16x64xf32>
    %cst_74 = arith.constant 1.000000e+00 : f32
    %152 = vector.broadcast %cst_74 : f32 to vector<16x64xf32>
    %153 = arith.addf %152, %151 : vector<16x64xf32>
    %cst_75 = arith.constant 1.000000e+00 : f32
    %154 = vector.broadcast %cst_75 : f32 to vector<16x64xf32>
    %155 = arith.divf %154, %153 : vector<16x64xf32>
    %cst_76 = arith.constant 1.06140542 : f32
    %156 = vector.broadcast %cst_76 : f32 to vector<16x64xf32>
    %157 = arith.mulf %156, %155 : vector<16x64xf32>
    %cst_77 = arith.constant -1.45315206 : f32
    %158 = vector.broadcast %cst_77 : f32 to vector<16x64xf32>
    %159 = arith.addf %157, %158 : vector<16x64xf32>
    %160 = arith.mulf %159, %155 : vector<16x64xf32>
    %cst_78 = arith.constant 1.42141378 : f32
    %161 = vector.broadcast %cst_78 : f32 to vector<16x64xf32>
    %162 = arith.addf %160, %161 : vector<16x64xf32>
    %163 = arith.mulf %162, %155 : vector<16x64xf32>
    %cst_79 = arith.constant -0.284496725 : f32
    %164 = vector.broadcast %cst_79 : f32 to vector<16x64xf32>
    %165 = arith.addf %163, %164 : vector<16x64xf32>
    %166 = arith.mulf %165, %155 : vector<16x64xf32>
    %cst_80 = arith.constant 0.254829586 : f32
    %167 = vector.broadcast %cst_80 : f32 to vector<16x64xf32>
    %168 = arith.addf %166, %167 : vector<16x64xf32>
    %169 = arith.mulf %168, %155 : vector<16x64xf32>
    %cst_81 = arith.constant 0.000000e+00 : f32
    %170 = vector.broadcast %cst_81 : f32 to vector<16x64xf32>
    %171 = arith.subf %170, %149 : vector<16x64xf32>
    %172 = arith.mulf %171, %149 : vector<16x64xf32>
    %173 = math.exp %172 : vector<16x64xf32>
    %174 = arith.mulf %169, %173 : vector<16x64xf32>
    %cst_82 = arith.constant 1.000000e+00 : f32
    %175 = vector.broadcast %cst_82 : f32 to vector<16x64xf32>
    %176 = arith.subf %175, %174 : vector<16x64xf32>
    %cst_83 = arith.constant 0.000000e+00 : f32
    %177 = vector.broadcast %cst_83 : f32 to vector<16x64xf32>
    %178 = arith.cmpf oge, %148, %177 : vector<16x64xf32>
    %cst_84 = arith.constant 0.000000e+00 : f32
    %179 = vector.broadcast %cst_84 : f32 to vector<16x64xf32>
    %180 = arith.subf %179, %176 : vector<16x64xf32>
    %181 = arith.select %178, %176, %180 : vector<16x64xi1>, vector<16x64xf32>
    %cst_85 = arith.constant 1.000000e+00 : f32
    %182 = vector.broadcast %cst_85 : f32 to vector<16x64xf32>
    %183 = arith.addf %182, %181 : vector<16x64xf32>
    %184 = arith.mulf %146, %183 : vector<16x64xf32>
    %c1_86 = arith.constant 1 : index
    %c0_87 = arith.constant 0 : index
    %c0_88 = arith.constant 0 : index
    %185 = vector.load %arg6[%c1_86, %c0_87, %c0_88] : memref<2x64x64xf32, #tpu.memory_space<vmem>>, vector<1x64x64xf32>
    %186 = vector.shape_cast %185 : vector<1x64x64xf32> to vector<64x64xf32>
    %cst_89 = arith.constant dense<0.000000e+00> : vector<16x64xf32>
    %187 = tpu.matmul %184, %186, %cst_89 {dimension_numbers = #tpu.dot_dimension_numbers<[1], [0], [0], [1], [0, 0, 1, 1], [], []>} : vector<16x64xf32>, vector<64x64xf32>, vector<16x64xf32> -> vector<16x64xf32>
    %c1_90 = arith.constant 1 : index
    %c0_91 = arith.constant 0 : index
    %c0_92 = arith.constant 0 : index
    %188 = vector.load %arg7[%c1_90, %c0_91, %c0_92] : memref<2x1x64xf32, #tpu.memory_space<vmem>>, vector<1x1x64xf32>
    %189 = vector.shape_cast %188 : vector<1x1x64xf32> to vector<1x64xf32>
    %190 = vector.broadcast %189 : vector<1x64xf32> to vector<16x64xf32>
    %191 = arith.addf %187, %190 : vector<16x64xf32>
    %192 = vector.extract_strided_slice %191 {offsets = [0, 0], sizes = [16, 32], strides = [1, 1]} : vector<16x64xf32> to vector<16x32xf32>
    %193 = vector.extract_strided_slice %191 {offsets = [0, 32], sizes = [16, 32], strides = [1, 1]} : vector<16x64xf32> to vector<16x32xf32>
    %194 = arith.negf %193 : vector<16x32xf32>
    %195 = math.exp %194 : vector<16x32xf32>
    %cst_93 = arith.constant 1.000000e+00 : f32
    %196 = vector.broadcast %cst_93 : f32 to vector<16x32xf32>
    %197 = arith.addf %196, %195 : vector<16x32xf32>
    %198 = arith.divf %196, %197 : vector<16x32xf32>
    %199 = arith.mulf %198, %192 : vector<16x32xf32>
    %200 = arith.addf %199, %137 : vector<16x32xf32>
    %201 = vector.shape_cast %200 : vector<16x32xf32> to vector<2x8x32xf32>
    %202 = tpu.transpose %201, [0, 2, 1] : vector<2x8x32xf32> -> vector<2x32x8xf32>
    %203 = vector.shape_cast %202 : vector<2x32x8xf32> to vector<64x8xf32>
    %c1_94 = arith.constant 1 : index
    %c0_95 = arith.constant 0 : index
    %c0_96 = arith.constant 0 : index
    %204 = vector.load %arg8[%c1_94, %c0_95, %c0_96] : memref<2x8x16xf32, #tpu.memory_space<vmem>>, vector<1x8x16xf32>
    %205 = vector.shape_cast %204 : vector<1x8x16xf32> to vector<8x16xf32>
    %cst_97 = arith.constant dense<0.000000e+00> : vector<64x16xf32>
    %206 = tpu.matmul %203, %205, %cst_97 {dimension_numbers = #tpu.dot_dimension_numbers<[1], [0], [0], [1], [0, 0, 1, 1], [], []>} : vector<64x8xf32>, vector<8x16xf32>, vector<64x16xf32> -> vector<64x16xf32>
    %c1_98 = arith.constant 1 : index
    %c0_99 = arith.constant 0 : index
    %c0_100 = arith.constant 0 : index
    %207 = vector.load %arg9[%c1_98, %c0_99, %c0_100] : memref<2x1x16xf32, #tpu.memory_space<vmem>>, vector<1x1x16xf32>
    %208 = vector.shape_cast %207 : vector<1x1x16xf32> to vector<1x16xf32>
    %209 = vector.broadcast %208 : vector<1x16xf32> to vector<64x16xf32>
    %210 = arith.addf %206, %209 : vector<64x16xf32>
    %cst_101 = arith.constant 5.000000e-01 : f32
    %211 = vector.broadcast %cst_101 : f32 to vector<64x16xf32>
    %212 = arith.mulf %211, %210 : vector<64x16xf32>
    %cst_102 = arith.constant 0.707106769 : f32
    %213 = vector.broadcast %cst_102 : f32 to vector<64x16xf32>
    %214 = arith.mulf %210, %213 : vector<64x16xf32>
    %215 = math.absf %214 : vector<64x16xf32>
    %cst_103 = arith.constant 0.327591091 : f32
    %216 = vector.broadcast %cst_103 : f32 to vector<64x16xf32>
    %217 = arith.mulf %216, %215 : vector<64x16xf32>
    %cst_104 = arith.constant 1.000000e+00 : f32
    %218 = vector.broadcast %cst_104 : f32 to vector<64x16xf32>
    %219 = arith.addf %218, %217 : vector<64x16xf32>
    %cst_105 = arith.constant 1.000000e+00 : f32
    %220 = vector.broadcast %cst_105 : f32 to vector<64x16xf32>
    %221 = arith.divf %220, %219 : vector<64x16xf32>
    %cst_106 = arith.constant 1.06140542 : f32
    %222 = vector.broadcast %cst_106 : f32 to vector<64x16xf32>
    %223 = arith.mulf %222, %221 : vector<64x16xf32>
    %cst_107 = arith.constant -1.45315206 : f32
    %224 = vector.broadcast %cst_107 : f32 to vector<64x16xf32>
    %225 = arith.addf %223, %224 : vector<64x16xf32>
    %226 = arith.mulf %225, %221 : vector<64x16xf32>
    %cst_108 = arith.constant 1.42141378 : f32
    %227 = vector.broadcast %cst_108 : f32 to vector<64x16xf32>
    %228 = arith.addf %226, %227 : vector<64x16xf32>
    %229 = arith.mulf %228, %221 : vector<64x16xf32>
    %cst_109 = arith.constant -0.284496725 : f32
    %230 = vector.broadcast %cst_109 : f32 to vector<64x16xf32>
    %231 = arith.addf %229, %230 : vector<64x16xf32>
    %232 = arith.mulf %231, %221 : vector<64x16xf32>
    %cst_110 = arith.constant 0.254829586 : f32
    %233 = vector.broadcast %cst_110 : f32 to vector<64x16xf32>
    %234 = arith.addf %232, %233 : vector<64x16xf32>
    %235 = arith.mulf %234, %221 : vector<64x16xf32>
    %cst_111 = arith.constant 0.000000e+00 : f32
    %236 = vector.broadcast %cst_111 : f32 to vector<64x16xf32>
    %237 = arith.subf %236, %215 : vector<64x16xf32>
    %238 = arith.mulf %237, %215 : vector<64x16xf32>
    %239 = math.exp %238 : vector<64x16xf32>
    %240 = arith.mulf %235, %239 : vector<64x16xf32>
    %cst_112 = arith.constant 1.000000e+00 : f32
    %241 = vector.broadcast %cst_112 : f32 to vector<64x16xf32>
    %242 = arith.subf %241, %240 : vector<64x16xf32>
    %cst_113 = arith.constant 0.000000e+00 : f32
    %243 = vector.broadcast %cst_113 : f32 to vector<64x16xf32>
    %244 = arith.cmpf oge, %214, %243 : vector<64x16xf32>
    %cst_114 = arith.constant 0.000000e+00 : f32
    %245 = vector.broadcast %cst_114 : f32 to vector<64x16xf32>
    %246 = arith.subf %245, %242 : vector<64x16xf32>
    %247 = arith.select %244, %242, %246 : vector<64x16xi1>, vector<64x16xf32>
    %cst_115 = arith.constant 1.000000e+00 : f32
    %248 = vector.broadcast %cst_115 : f32 to vector<64x16xf32>
    %249 = arith.addf %248, %247 : vector<64x16xf32>
    %250 = arith.mulf %212, %249 : vector<64x16xf32>
    %c1_116 = arith.constant 1 : index
    %c0_117 = arith.constant 0 : index
    %c0_118 = arith.constant 0 : index
    %251 = vector.load %arg10[%c1_116, %c0_117, %c0_118] : memref<2x16x16xf32, #tpu.memory_space<vmem>>, vector<1x16x16xf32>
    %252 = vector.shape_cast %251 : vector<1x16x16xf32> to vector<16x16xf32>
    %cst_119 = arith.constant dense<0.000000e+00> : vector<64x16xf32>
    %253 = tpu.matmul %250, %252, %cst_119 {dimension_numbers = #tpu.dot_dimension_numbers<[1], [0], [0], [1], [0, 0, 1, 1], [], []>} : vector<64x16xf32>, vector<16x16xf32>, vector<64x16xf32> -> vector<64x16xf32>
    %c1_120 = arith.constant 1 : index
    %c0_121 = arith.constant 0 : index
    %c0_122 = arith.constant 0 : index
    %254 = vector.load %arg11[%c1_120, %c0_121, %c0_122] : memref<2x1x16xf32, #tpu.memory_space<vmem>>, vector<1x1x16xf32>
    %255 = vector.shape_cast %254 : vector<1x1x16xf32> to vector<1x16xf32>
    %256 = vector.broadcast %255 : vector<1x16xf32> to vector<64x16xf32>
    %257 = arith.addf %253, %256 : vector<64x16xf32>
    %258 = vector.extract_strided_slice %257 {offsets = [0, 0], sizes = [64, 8], strides = [1, 1]} : vector<64x16xf32> to vector<64x8xf32>
    %259 = vector.extract_strided_slice %257 {offsets = [0, 8], sizes = [64, 8], strides = [1, 1]} : vector<64x16xf32> to vector<64x8xf32>
    %260 = arith.negf %259 : vector<64x8xf32>
    %261 = math.exp %260 : vector<64x8xf32>
    %cst_123 = arith.constant 1.000000e+00 : f32
    %262 = vector.broadcast %cst_123 : f32 to vector<64x8xf32>
    %263 = arith.addf %262, %261 : vector<64x8xf32>
    %264 = arith.divf %262, %263 : vector<64x8xf32>
    %265 = arith.mulf %264, %258 : vector<64x8xf32>
    %266 = arith.addf %265, %203 : vector<64x8xf32>
    %267 = vector.shape_cast %266 : vector<64x8xf32> to vector<2x32x8xf32>
    %c0_124 = arith.constant 0 : index
    %c0_125 = arith.constant 0 : index
    %268 = vector.load %arg12[%c0_124, %c0_125] : memref<32x8xf32, #tpu.memory_space<vmem>>, vector<32x8xf32>
    %269 = vector.shape_cast %268 : vector<32x8xf32> to vector<1x32x8xf32>
    %270 = vector.broadcast %269 : vector<1x32x8xf32> to vector<2x32x8xf32>
    %271 = arith.mulf %267, %270 : vector<2x32x8xf32>
    %cst_126 = arith.constant dense<0.000000e+00> : vector<2x32xf32>
    %272 = vector.multi_reduction <add>, %271, %cst_126 [2] : vector<2x32x8xf32> to vector<2x32xf32>
    %cst_127 = arith.constant dense<0.000000e+00> : vector<2xf32>
    %273 = vector.multi_reduction <add>, %272, %cst_127 [1] : vector<2x32xf32> to vector<2xf32>
    %274 = vector.shape_cast %273 : vector<2xf32> to vector<1x2xf32>
    %c0_128 = arith.constant 0 : index
    %c0_129 = arith.constant 0 : index
    %275 = vector.load %arg13[%c0_128, %c0_129] : memref<1x1xf32, #tpu.memory_space<vmem>>, vector<1x1xf32>
    %276 = vector.broadcast %275 : vector<1x1xf32> to vector<1x2xf32>
    %277 = arith.addf %274, %276 : vector<1x2xf32>
    %278 = vector.shape_cast %277 : vector<1x2xf32> to vector<1x1x2xf32>
    %c0_130 = arith.constant 0 : index
    %c0_131 = arith.constant 0 : index
    %c0_132 = arith.constant 0 : index
    %279 = vector.load %arg14[%c0_130, %c0_131, %c0_132] : memref<1x1x2xf32, #tpu.memory_space<vmem>>, vector<1x1x2xf32>
    tpu.vector_store %arg14[%c0_130, %c0_131, %c0_132], %278 {strides = array<i32>} : memref<1x1x2xf32, #tpu.memory_space<vmem>>, vector<1x1x2xf32>,
    return
  }
  func.func @transform_0(%arg0: i32) -> (i32, i32) {
    %c0_i32 = arith.constant 0 : i32
    %c0_i32_0 = arith.constant 0 : i32
    return %arg0, %c0_i32 : i32, i32
  }
  func.func @transform_1(%arg0: i32) -> (i32, i32) {
    %c0_i32 = arith.constant 0 : i32
    %c0_i32_0 = arith.constant 0 : i32
    %c0_i32_1 = arith.constant 0 : i32
    return %c0_i32, %c0_i32_0 : i32, i32
  }
  func.func @transform_2(%arg0: i32) -> (i32, i32) {
    %c0_i32 = arith.constant 0 : i32
    %c0_i32_0 = arith.constant 0 : i32
    %c0_i32_1 = arith.constant 0 : i32
    return %c0_i32, %c0_i32_0 : i32, i32
  }
  func.func @transform_3(%arg0: i32) -> (i32, i32, i32) {
    %c0_i32 = arith.constant 0 : i32
    %c0_i32_0 = arith.constant 0 : i32
    %c0_i32_1 = arith.constant 0 : i32
    %c0_i32_2 = arith.constant 0 : i32
    return %c0_i32, %c0_i32_0, %c0_i32_1 : i32, i32, i32
  }
  func.func @transform_4(%arg0: i32) -> (i32, i32, i32) {
    %c0_i32 = arith.constant 0 : i32
    %c0_i32_0 = arith.constant 0 : i32
    %c0_i32_1 = arith.constant 0 : i32
    %c0_i32_2 = arith.constant 0 : i32
    return %c0_i32, %c0_i32_0, %c0_i32_1 : i32, i32, i32
  }
  func.func @transform_5(%arg0: i32) -> (i32, i32, i32) {
    %c0_i32 = arith.constant 0 : i32
    %c0_i32_0 = arith.constant 0 : i32
    %c0_i32_1 = arith.constant 0 : i32
    %c0_i32_2 = arith.constant 0 : i32
    return %c0_i32, %c0_i32_0, %c0_i32_1 : i32, i32, i32
  }
  func.func @transform_6(%arg0: i32) -> (i32, i32, i32) {
    %c0_i32 = arith.constant 0 : i32
    %c0_i32_0 = arith.constant 0 : i32
    %c0_i32_1 = arith.constant 0 : i32
    %c0_i32_2 = arith.constant 0 : i32
    return %c0_i32, %c0_i32_0, %c0_i32_1 : i32, i32, i32
  }
  func.func @transform_7(%arg0: i32) -> (i32, i32, i32) {
    %c0_i32 = arith.constant 0 : i32
    %c0_i32_0 = arith.constant 0 : i32
    %c0_i32_1 = arith.constant 0 : i32
    %c0_i32_2 = arith.constant 0 : i32
    return %c0_i32, %c0_i32_0, %c0_i32_1 : i32, i32, i32
  }
  func.func @transform_8(%arg0: i32) -> (i32, i32, i32) {
    %c0_i32 = arith.constant 0 : i32
    %c0_i32_0 = arith.constant 0 : i32
    %c0_i32_1 = arith.constant 0 : i32
    %c0_i32_2 = arith.constant 0 : i32
    return %c0_i32, %c0_i32_0, %c0_i32_1 : i32, i32, i32
  }
  func.func @transform_9(%arg0: i32) -> (i32, i32, i32) {
    %c0_i32 = arith.constant 0 : i32
    %c0_i32_0 = arith.constant 0 : i32
    %c0_i32_1 = arith.constant 0 : i32
    %c0_i32_2 = arith.constant 0 : i32
    return %c0_i32, %c0_i32_0, %c0_i32_1 : i32, i32, i32
  }
  func.func @transform_10(%arg0: i32) -> (i32, i32, i32) {
    %c0_i32 = arith.constant 0 : i32
    %c0_i32_0 = arith.constant 0 : i32
    %c0_i32_1 = arith.constant 0 : i32
    %c0_i32_2 = arith.constant 0 : i32
    return %c0_i32, %c0_i32_0, %c0_i32_1 : i32, i32, i32
  }
  func.func @transform_11(%arg0: i32) -> (i32, i32) {
    %c0_i32 = arith.constant 0 : i32
    %c0_i32_0 = arith.constant 0 : i32
    %c0_i32_1 = arith.constant 0 : i32
    return %c0_i32, %c0_i32_0 : i32, i32
  }
  func.func @transform_12(%arg0: i32) -> (i32, i32) {
    %c0_i32 = arith.constant 0 : i32
    %c0_i32_0 = arith.constant 0 : i32
    %c0_i32_1 = arith.constant 0 : i32
    return %c0_i32, %c0_i32_0 : i32, i32
  }
  func.func @transform_13(%arg0: i32) -> (i32, i32, i32) {
    %c0_i32 = arith.constant 0 : i32
    %c0_i32_0 = arith.constant 0 : i32
    %c0_i32_1 = arith.constant 0 : i32
    return %arg0, %c0_i32, %c0_i32_0 : i32, i32, i32
  }
}

</mosaic_0001>

<llo_original>
// kernel: tpu_custom_call.1
$region0: #{tpu_custom_call.1}
  #allocation0 [shape = 'u32[]', space=smem, size = 0x4, offset = 0x4, fixed_abs, tag = 'smem constant byte address 0x4 - core index']
  #allocation1 [shape = 'u32[72,128]{1,0:T(1,128)}', space=vmem, size = 0x9000, scoped, tag = 'internal scratch']
  #allocation2 [shape = 'f32[1,1]{1,0:T(1,128)S(1)}', space=vmem, size = 0x200, scoped, tag = 'scoped memory for tpu_custom_call.1']
  %s0 = inlined_call_operand.hbm [shape: f32[16,16], index: 0, kind: input, shape index: {}]
  %s1 = inlined_call_operand.hbm [shape: f32[16,32], index: 1, kind: input, shape index: {}]
  %s2 = inlined_call_operand.vmem [shape: f32[1,32], index: 2, kind: input, shape index: {}]
  %s3 = inlined_call_operand.hbm [shape: f32[2,32,64], index: 3, kind: input, shape index: {}]
  %s4 = inlined_call_operand.vmem [shape: f32[2,1,64], index: 4, kind: input, shape index: {}]
  %s5 = inlined_call_operand.hbm [shape: f32[2,64,64], index: 5, kind: input, shape index: {}]
  %s6 = inlined_call_operand.vmem [shape: f32[2,1,64], index: 6, kind: input, shape index: {}]
  %s7 = inlined_call_operand.hbm [shape: f32[2,8,16], index: 7, kind: input, shape index: {}]
  %s8 = inlined_call_operand.vmem [shape: f32[2,1,16], index: 8, kind: input, shape index: {}]
  %s9 = inlined_call_operand.vmem [shape: f32[2,16,16], index: 9, kind: input, shape index: {}]
  %s10 = inlined_call_operand.vmem [shape: f32[2,1,16], index: 10, kind: input, shape index: {}]
  %s11 = inlined_call_operand.vmem [shape: f32[32,8], index: 11, kind: input, shape index: {}]
  %s12 = inlined_call_operand.<no memory space> [shape: f32[1,1], index: 12, kind: input, shape index: {}]
  %s13 = inlined_call_operand.hbm [shape: f32[1,1,2], index: 13, kind: output, shape index: {}]
  %s14 = sld [smem:[#allocation0]]
  $region82: #{tpu_custom_call.1} parent=0
    _
  %s16 = ssub.s32 1, %s14
  %s17 = scalar_select 0, %s16, %s14
  %v18 = vstv %s12
  %19 = vst [vmem:[#allocation2] sm:$0x1] %v18
  $region1: #{tpu_custom_call.1} parent=0
    #allocation3 [shape = 'u8[8192]{0}', space=vmem, size = 0x2000, scoped, tag = 'input window, operand 0, single buffered']
    #allocation4 [shape = 's32[1]{0}', space=sflag, size = 0x4, scoped, tag = 'scoped memory for tpu_custom_call.1']
    #allocation5 [shape = 's32[1]{0}', space=sflag, size = 0x4, scoped, tag = 'scoped memory for tpu_custom_call.1']
    #allocation6 [shape = 'u8[8192]{0}', space=vmem, size = 0x2000, scoped, tag = 'input window, operand 1, single buffered']
    #allocation7 [shape = 's32[1]{0}', space=sflag, size = 0x4, scoped, tag = 'scoped memory for tpu_custom_call.1']
    #allocation8 [shape = 'u8[32768]{0}', space=vmem, size = 0x8000, scoped, tag = 'input window, operand 3, single buffered']
    #allocation9 [shape = 'u8[65536]{0}', space=vmem, size = 0x10000, scoped, tag = 'input window, operand 5, single buffered']
    #allocation10 [shape = 's32[1]{0}', space=sflag, size = 0x4, scoped, tag = 'scoped memory for tpu_custom_call.1']
    #allocation11 [shape = 'u8[8192]{0}', space=vmem, size = 0x2000, scoped, tag = 'input window, operand 7, single buffered']
    #allocation12 [shape = 'u8[512]{0}', space=vmem, size = 0x400, scoped, tag = 'output window, operand 0, single buffered']
    %20 = vsyncpa [#allocation4], 0
    %21 = vsyncpa [#allocation7], 0
    %22 = vsyncpa [#allocation10], 0
    %23 = vsyncpa [#allocation5], 0
    // Predicated region
    $region2: #{tpu_custom_call.1} parent=1 // pred_check
      _
    $region3: #{tpu_custom_call.1} parent=1 // pred_check_branch
      %25 = sbr.rel (0) target = $region5
    $region4: #{tpu_custom_call.1} parent=1 // pred_region
      %27 = vsyncadd [#allocation4], 0
      %s28 = sshll.u32 %s0, 4
      %s29 = int_to_ptr.hbm [resolvable:$true] %s28
      %s30 = sshll.u32 [#allocation3], 4
      %s31 = int_to_ptr.vmem [resolvable:$true] %s30
      %36 = dma.hbm_to_vmem [thread:$0]  %s29, 256, %s31, [#allocation4], 128, 128, 8
    $region5: #{tpu_custom_call.1} parent=1 // pred_fallthru
      _
    // Predicated region
    $region6: #{tpu_custom_call.1} parent=1 // pred_check
      _
    $region7: #{tpu_custom_call.1} parent=1 // pred_check_branch
      %38 = sbr.rel (0) target = $region9
    $region8: #{tpu_custom_call.1} parent=1 // pred_region
      %40 = vsyncadd [#allocation7], 0
      %s41 = sshll.u32 %s1, 4
      %s42 = int_to_ptr.hbm [resolvable:$true] %s41
      %s43 = sshll.u32 [#allocation6], 4
      %s44 = int_to_ptr.vmem [resolvable:$true] %s43
      %49 = dma.hbm_to_vmem [thread:$0]  %s42, 256, %s44, [#allocation7], 128, 128, 8
    $region9: #{tpu_custom_call.1} parent=1 // pred_fallthru
      _
    // Predicated region
    $region10: #{tpu_custom_call.1} parent=1 // pred_check
      _
    $region11: #{tpu_custom_call.1} parent=1 // pred_check_branch
      %51 = sbr.rel (0) target = $region13
    $region12: #{tpu_custom_call.1} parent=1 // pred_region
      _
    $region13: #{tpu_custom_call.1} parent=1 // pred_fallthru
      _
    // Predicated region
    $region14: #{tpu_custom_call.1} parent=1 // pred_check
      _
    $region15: #{tpu_custom_call.1} parent=1 // pred_check_branch
      %53 = sbr.rel (0) target = $region17
    $region16: #{tpu_custom_call.1} parent=1 // pred_region
      %55 = vsyncadd [#allocation7], 0
      %s56 = sshll.u32 %s3, 4
      %s57 = int_to_ptr.hbm [resolvable:$true] %s56
      %s58 = sshll.u32 [#allocation8], 4
      %s59 = int_to_ptr.vmem [resolvable:$true] %s58
      %64 = dma.hbm_to_vmem [thread:$0]  %s57, 1024, %s59, [#allocation7], 128, 128, 8
    $region17: #{tpu_custom_call.1} parent=1 // pred_fallthru
      _
    // Predicated region
    $region18: #{tpu_custom_call.1} parent=1 // pred_check
      _
    $region19: #{tpu_custom_call.1} parent=1 // pred_check_branch
      %66 = sbr.rel (0) target = $region21
    $region20: #{tpu_custom_call.1} parent=1 // pred_region
      _
    $region21: #{tpu_custom_call.1} parent=1 // pred_fallthru
      _
    // Predicated region
    $region22: #{tpu_custom_call.1} parent=1 // pred_check
      _
    $region23: #{tpu_custom_call.1} parent=1 // pred_check_branch
      %68 = sbr.rel (0) target = $region25
    $region24: #{tpu_custom_call.1} parent=1 // pred_region
      %70 = vsyncadd [#allocation10], 0
      %s71 = sshll.u32 %s5, 4
      %s72 = int_to_ptr.hbm [resolvable:$true] %s71
      %s73 = sshll.u32 [#allocation9], 4
      %s74 = int_to_ptr.vmem [resolvable:$true] %s73
      %79 = dma.hbm_to_vmem [thread:$0]  %s72, 2048, %s74, [#allocation10], 128, 128, 8
    $region25: #{tpu_custom_call.1} parent=1 // pred_fallthru
      _
    // Predicated region
    $region26: #{tpu_custom_call.1} parent=1 // pred_check
      _
    $region27: #{tpu_custom_call.1} parent=1 // pred_check_branch
      %81 = sbr.rel (0) target = $region29
    $region28: #{tpu_custom_call.1} parent=1 // pred_region
      _
    $region29: #{tpu_custom_call.1} parent=1 // pred_fallthru
      _
    // Predicated region
    $region30: #{tpu_custom_call.1} parent=1 // pred_check
      _
    $region31: #{tpu_custom_call.1} parent=1 // pred_check_branch
      %83 = sbr.rel (0) target = $region33
    $region32: #{tpu_custom_call.1} parent=1 // pred_region
      %85 = vsyncadd [#allocation10], 0
      %s86 = sshll.u32 %s7, 4
      %s87 = int_to_ptr.hbm [resolvable:$true] %s86
      %s88 = sshll.u32 [#allocation11], 4
      %s89 = int_to_ptr.vmem [resolvable:$true] %s88
      %94 = dma.hbm_to_vmem [thread:$0]  %s87, 256, %s89, [#allocation10], 128, 128, 8
    $region33: #{tpu_custom_call.1} parent=1 // pred_fallthru
      _
    // Predicated region
    $region34: #{tpu_custom_call.1} parent=1 // pred_check
      _
    $region35: #{tpu_custom_call.1} parent=1 // pred_check_branch
      %96 = sbr.rel (0) target = $region37
    $region36: #{tpu_custom_call.1} parent=1 // pred_region
      _
    $region37: #{tpu_custom_call.1} parent=1 // pred_fallthru
      _
    // Predicated region
    $region38: #{tpu_custom_call.1} parent=1 // pred_check
      _
    $region39: #{tpu_custom_call.1} parent=1 // pred_check_branch
      %98 = sbr.rel (0) target = $region41
    $region40: #{tpu_custom_call.1} parent=1 // pred_region
      _
    $region41: #{tpu_custom_call.1} parent=1 // pred_fallthru
      _
    // Predicated region
    $region42: #{tpu_custom_call.1} parent=1 // pred_check
      _
    $region43: #{tpu_custom_call.1} parent=1 // pred_check_branch
      %100 = sbr.rel (0) target = $region45
    $region44: #{tpu_custom_call.1} parent=1 // pred_region
      _
    $region45: #{tpu_custom_call.1} parent=1 // pred_fallthru
      _
    // Predicated region
    $region46: #{tpu_custom_call.1} parent=1 // pred_check
      _
    $region47: #{tpu_custom_call.1} parent=1 // pred_check_branch
      %102 = sbr.rel (0) target = $region49
    $region48: #{tpu_custom_call.1} parent=1 // pred_region
      _
    $region49: #{tpu_custom_call.1} parent=1 // pred_fallthru
      _
    // Predicated region
    $region50: #{tpu_custom_call.1} parent=1 // pred_check
      _
    $region51: #{tpu_custom_call.1} parent=1 // pred_check_branch
      %104 = sbr.rel (0) target = $region53
    $region52: #{tpu_custom_call.1} parent=1 // pred_region
      _
    $region53: #{tpu_custom_call.1} parent=1 // pred_fallthru
      _
    // Predicated region
    $region54: #{tpu_custom_call.1} parent=1 // pred_check
      _
    $region55: #{tpu_custom_call.1} parent=1 // pred_check_branch
      %106 = sbr.rel (0) target = $region57
    $region56: #{tpu_custom_call.1} parent=1 // pred_region
      %108 = dma.done [#allocation4], 256
    $region57: #{tpu_custom_call.1} parent=1 // pred_fallthru
      _
    // Predicated region
    $region58: #{tpu_custom_call.1} parent=1 // pred_check
      _
    $region59: #{tpu_custom_call.1} parent=1 // pred_check_branch
      %110 = sbr.rel (0) target = $region61
    $region60: #{tpu_custom_call.1} parent=1 // pred_region
      %112 = dma.done [#allocation7], 256
    $region61: #{tpu_custom_call.1} parent=1 // pred_fallthru
      _
    // Predicated region
    $region62: #{tpu_custom_call.1} parent=1 // pred_check
      _
    $region63: #{tpu_custom_call.1} parent=1 // pred_check_branch
      %114 = sbr.rel (0) target = $region65
    $region64: #{tpu_custom_call.1} parent=1 // pred_region
      %116 = dma.done [#allocation7], 1024
    $region65: #{tpu_custom_call.1} parent=1 // pred_fallthru
      _
    // Predicated region
    $region66: #{tpu_custom_call.1} parent=1 // pred_check
      _
    $region67: #{tpu_custom_call.1} parent=1 // pred_check_branch
      %118 = sbr.rel (0) target = $region69
    $region68: #{tpu_custom_call.1} parent=1 // pred_region
      %120 = dma.done [#allocation10], 2048
    $region69: #{tpu_custom_call.1} parent=1 // pred_fallthru
      _
    // Predicated region
    $region70: #{tpu_custom_call.1} parent=1 // pred_check
      _
    $region71: #{tpu_custom_call.1} parent=1 // pred_check_branch
      %122 = sbr.rel (0) target = $region73
    $region72: #{tpu_custom_call.1} parent=1 // pred_region
      %124 = dma.done [#allocation10], 256
    $region73: #{tpu_custom_call.1} parent=1 // pred_fallthru
      _
    %v125 = vld [vmem:[#allocation3] sm:$0xff]
    %v126 = vld [vmem:[#allocation3 + $0x8] sm:$0xff]
    %v127 = vld [vmem:[#allocation6] sm:$0xff]
    %v128 = vld [vmem:[#allocation6 + $0x8] sm:$0xff]
    %v129 = vld [vmem:[%s2] sm:$0x1]
    %v131 = vperm.slane %v129, 0
    %vm133 = vcmask 130048
    %v135 = vsel %vm133, %v125, 0
    %v138 = vsel %vm133, %v126, 0
    %140 = vmatpush.msra.mxu0 0.0
    %141 = vmatpush.msra.mxu0 0.0
    %142 = vmatpush.msra.mxu0 0.0
    %143 = vmatpush.msra.mxu0 0.0
    %144 = vmatpush.msra.mxu0 0.0
    %145 = vmatpush.msra.mxu0 0.0
    %146 = vmatpush.msra.mxu0 0.0
    %147 = vmatpush.msra.mxu0 0.0
    %148 = vmatpush.msra.mxu0 0.0
    %149 = vmatpush.msra.mxu0 0.0
    %150 = vmatpush.msra.mxu0 0.0
    %151 = vmatpush.msra.mxu0 0.0
    %152 = vmatpush.msra.mxu0 0.0
    %153 = vmatpush.msra.mxu0 0.0
    %154 = vmatpush.msra.mxu0 %v128
    %155 = vmatpush.msra.mxu0 %v127
    %156 = vmatmul.f32.gmra.mxu0 %v135
    %v157 = vpop.f32.mrf.mxu0
    %v158 = vadd.f32 %v131, %v157
    %159 = vmatmul.f32.gmra.mxu0 %v138
    %v160 = vpop.f32.mrf.mxu0
    %v161 = vadd.f32 %v131, %v160
    %162 = vdwg.mxu0
    %v163 = vld [vmem:[#allocation8] sm:$0xff]
    %v164 = vld [vmem:[#allocation8 + $0x8] sm:$0xff]
    %v165 = vld [vmem:[#allocation8 + $0x10] sm:$0xff]
    %v166 = vld [vmem:[#allocation8 + $0x18] sm:$0xff]
    %v167 = vld [vmem:[%s4] sm:$0x1]
    %v169 = vperm.slane %v167, 0
    %vm171 = vcmask 261120
    %v173 = vsel %vm171, %v158, 0
    %v176 = vsel %vm171, %v161, 0
    %178 = vmatpush.msra.mxu0 0.0
    %179 = vmatpush.msra.mxu0 0.0
    %180 = vmatpush.msra.mxu0 0.0
    %181 = vmatpush.msra.mxu0 0.0
    %182 = vmatpush.msra.mxu0 0.0
    %183 = vmatpush.msra.mxu0 0.0
    %184 = vmatpush.msra.mxu0 0.0
    %185 = vmatpush.msra.mxu0 0.0
    %186 = vmatpush.msra.mxu0 0.0
    %187 = vmatpush.msra.mxu0 0.0
    %188 = vmatpush.msra.mxu0 0.0
    %189 = vmatpush.msra.mxu0 0.0
    %190 = vmatpush.msra.mxu0 %v166
    %191 = vmatpush.msra.mxu0 %v165
    %192 = vmatpush.msra.mxu0 %v164
    %193 = vmatpush.msra.mxu0 %v163
    %194 = vmatmul.f32.gmra.mxu0 %v173
    %v195 = vpop.f32.mrf.mxu0
    %v196 = vadd.f32 %v169, %v195
    %197 = vmatmul.f32.gmra.mxu0 %v176
    %v198 = vpop.f32.mrf.mxu0
    %v199 = vadd.f32 %v169, %v198
    %200 = vdwg.mxu0
    %v201 = vmul.f32 %v196, 0.5
    %v202 = vmul.f32 %v199, 0.5
    %v203 = vmul.f32 %v196, 0.70710677
    %v204 = vmul.f32 %v199, 0.70710677
    %v205 = vand.u32 2147483647, %v203
    %v206 = vand.u32 2147483647, %v204
    %v207 = vmul.f32 %v205, 0.3275911
    %v208 = vmul.f32 %v206, 0.3275911
    %v209 = vadd.f32 %v207, 1.0
    %v210 = vadd.f32 %v208, 1.0
    %v211 = vrcp.pop %v209
    %v212 = vmul.f32 %v209, %v211
    %v213 = vsub.f32 1.0, %v212
    %v214 = vmul.f32 %v211, %v213
    %v215 = vadd.f32 %v211, %v214
    %vm216 = vweird.f32 %v209
    %vm217 = vweird.f32 %v211
    %vm218 = vmor %vm216, %vm217
    %v219 = vsel %vm218, %v211, %v215
    %v220 = vand.u32 2147483647, %v209
    %vm221 = vcmp.eq.f32.partialorder %v220, 8.507059e+37
    %v222 = vand.u32 %v209, 2147483648
    %v223 = vor.u32 1.1754944e-38, %v222
    %v224 = vsel %vm221, %v223, %v219
    %v225 = vmul.f32 1.0, %v224
    %v226 = vrcp.pop %v210
    %v227 = vmul.f32 %v210, %v226
    %v228 = vsub.f32 1.0, %v227
    %v229 = vmul.f32 %v226, %v228
    %v230 = vadd.f32 %v226, %v229
    %vm231 = vweird.f32 %v210
    %vm232 = vweird.f32 %v226
    %vm233 = vmor %vm231, %vm232
    %v234 = vsel %vm233, %v226, %v230
    %v235 = vand.u32 2147483647, %v210
    %vm236 = vcmp.eq.f32.partialorder %v235, 8.507059e+37
    %v237 = vand.u32 %v210, 2147483648
    %v238 = vor.u32 1.1754944e-38, %v237
    %v239 = vsel %vm236, %v238, %v234
    %v240 = vmul.f32 1.0, %v239
    %v241 = vmul.f32 %v225, 1.0614054
    %v242 = vmul.f32 %v240, 1.0614054
    %v243 = vadd.f32 %v241, -1.4531521
    %v244 = vadd.f32 %v242, -1.4531521
    %v245 = vmul.f32 %v243, %v225
    %v246 = vmul.f32 %v244, %v240
    %v247 = vadd.f32 %v245, 1.4214138
    %v248 = vadd.f32 %v246, 1.4214138
    %v249 = vmul.f32 %v247, %v225
    %v250 = vmul.f32 %v248, %v240
    %v251 = vadd.f32 %v249, -0.28449672
    %v252 = vadd.f32 %v250, -0.28449672
    %v253 = vmul.f32 %v251, %v225
    %v254 = vmul.f32 %v252, %v240
    %v255 = vadd.f32 %v253, 0.2548296
    %v256 = vadd.f32 %v254, 0.2548296
    %v257 = vmul.f32 %v255, %v225
    %v258 = vmul.f32 %v256, %v240
    %v259 = vsub.f32 0.0, %v205
    %v260 = vsub.f32 0.0, %v206
    %v261 = vmul.f32 %v259, %v205
    %v262 = vmul.f32 %v260, %v206
    %v263 = vmul.f32 %v261, 1.442695
    %v264 = vpow.pop %v263
    %v265 = vmul.f32 %v262, 1.442695
    %v266 = vpow.pop %v265
    %v267 = vmul.f32 %v257, %v264
    %v268 = vmul.f32 %v258, %v266
    %v269 = vsub.f32 1.0, %v267
    %v270 = vsub.f32 1.0, %v268
    %vm271 = vcmp.ge.f32.partialorder %v203, 0.0
    %vm272 = vcmp.ge.f32.partialorder %v204, 0.0
    %v273 = vsub.f32 0.0, %v269
    %v274 = vsub.f32 0.0, %v270
    %v275 = vsel %vm271, %v269, %v273
    %v276 = vsel %vm272, %v270, %v274
    %v277 = vadd.f32 %v275, 1.0
    %v278 = vadd.f32 %v276, 1.0
    %v279 = vmul.f32 %v201, %v277
    %v280 = vmul.f32 %v202, %v278
    %v281 = vld [vmem:[#allocation9] sm:$0xff]
    %v282 = vld [vmem:[#allocation9 + $0x8] sm:$0xff]
    %v283 = vld [vmem:[#allocation9 + $0x10] sm:$0xff]
    %v284 = vld [vmem:[#allocation9 + $0x18] sm:$0xff]
    %v285 = vld [vmem:[#allocation9 + $0x20] sm:$0xff]
    %v286 = vld [vmem:[#allocation9 + $0x28] sm:$0xff]
    %v287 = vld [vmem:[#allocation9 + $0x30] sm:$0xff]
    %v288 = vld [vmem:[#allocation9 + $0x38] sm:$0xff]
    %v289 = vld [vmem:[%s6] sm:$0x1]
    %v291 = vperm.slane %v289, 0
    %vm293 = vcmask 523264
    %v295 = vsel %vm293, %v279, 0
    %v298 = vsel %vm293, %v280, 0
    %300 = vmatpush.msra.mxu0 0.0
    %301 = vmatpush.msra.mxu0 0.0
    %302 = vmatpush.msra.mxu0 0.0
    %303 = vmatpush.msra.mxu0 0.0
    %304 = vmatpush.msra.mxu0 0.0
    %305 = vmatpush.msra.mxu0 0.0
    %306 = vmatpush.msra.mxu0 0.0
    %307 = vmatpush.msra.mxu0 0.0
    %308 = vmatpush.msra.mxu0 %v288
    %309 = vmatpush.msra.mxu0 %v287
    %310 = vmatpush.msra.mxu0 %v286
    %311 = vmatpush.msra.mxu0 %v285
    %312 = vmatpush.msra.mxu0 %v284
    %313 = vmatpush.msra.mxu0 %v283
    %314 = vmatpush.msra.mxu0 %v282
    %315 = vmatpush.msra.mxu0 %v281
    %316 = vmatmul.f32.gmra.mxu0 %v295
    %v317 = vpop.f32.mrf.mxu0
    %v318 = vadd.f32 %v291, %v317
    %319 = vmatmul.f32.gmra.mxu0 %v298
    %v320 = vpop.f32.mrf.mxu0
    %v321 = vadd.f32 %v291, %v320
    %322 = vdwg.mxu0
    %v323 = vxor.u32 %v318, 2147483648
    %v324 = vxor.u32 %v321, 2147483648
    %v325 = vmul.f32 %v323, 1.442695
    %v326 = vpow.pop %v325
    %v327 = vmul.f32 %v324, 1.442695
    %v328 = vpow.pop %v327
    %v329 = vadd.f32 %v326, 1.0
    %v330 = vadd.f32 %v328, 1.0
    %v331 = vrcp.pop %v329
    %v332 = vmul.f32 %v329, %v331
    %v333 = vsub.f32 1.0, %v332
    %v334 = vmul.f32 %v331, %v333
    %v335 = vadd.f32 %v331, %v334
    %vm336 = vweird.f32 %v329
    %vm337 = vweird.f32 %v331
    %vm338 = vmor %vm336, %vm337
    %v339 = vsel %vm338, %v331, %v335
    %v340 = vand.u32 2147483647, %v329
    %vm341 = vcmp.eq.f32.partialorder %v340, 8.507059e+37
    %v342 = vand.u32 %v329, 2147483648
    %v343 = vor.u32 1.1754944e-38, %v342
    %v344 = vsel %vm341, %v343, %v339
    %v345 = vmul.f32 1.0, %v344
    %v346 = vrcp.pop %v330
    %v347 = vmul.f32 %v330, %v346
    %v348 = vsub.f32 1.0, %v347
    %v349 = vmul.f32 %v346, %v348
    %v350 = vadd.f32 %v346, %v349
    %vm351 = vweird.f32 %v330
    %vm352 = vweird.f32 %v346
    %vm353 = vmor %vm351, %vm352
    %v354 = vsel %vm353, %v346, %v350
    %v355 = vand.u32 2147483647, %v330
    %vm356 = vcmp.eq.f32.partialorder %v355, 8.507059e+37
    %v357 = vand.u32 %v330, 2147483648
    %v358 = vor.u32 1.1754944e-38, %v357
    %v359 = vsel %vm356, %v358, %v354
    %v360 = vmul.f32 1.0, %v359
    %363 = vrot.lane.b32.xlu0 %v318, 32
    %v364 = vpop.permute.xlu0 %363
    %365 = vrot.lane.b32.xlu0 %v321, 32
    %v366 = vpop.permute.xlu0 %365
    %v369 = vmul.f32 %v345, %v364
    %v370 = vmul.f32 %v360, %v366
    %371 = vrot.lane.b32.xlu0 %v158, 32
    %v372 = vpop.permute.xlu0 %371
    %373 = vrot.lane.b32.xlu0 %v161, 32
    %v374 = vpop.permute.xlu0 %373
    %v377 = vadd.f32 %v369, %v372
    %v378 = vadd.f32 %v370, %v374
    %381 = vrot.lane.b32.xlu0 %v377, 96
    %v382 = vpop.permute.xlu0 %381
    %383 = vrot.lane.b32.xlu0 %v378, 96
    %v384 = vpop.permute.xlu0 %383
    %387 = vxpose.xlu0.b32.start [1/16] %v382, 128
    %388 = vxpose.xlu0.b32.cont [2/16] 0.0, 128
    %389 = vxpose.xlu0.b32.cont [3/16] 0.0, 128
    %390 = vxpose.xlu0.b32.cont [4/16] 0.0, 128
    %391 = vxpose.xlu0.b32.cont [5/16] 0.0, 128
    %392 = vxpose.xlu0.b32.cont [6/16] 0.0, 128
    %393 = vxpose.xlu0.b32.cont [7/16] 0.0, 128
    %394 = vxpose.xlu0.b32.cont [8/16] 0.0, 128
    %395 = vxpose.xlu0.b32.cont [9/16] 0.0, 128
    %396 = vxpose.xlu0.b32.cont [10/16] 0.0, 128
    %397 = vxpose.xlu0.b32.cont [11/16] 0.0, 128
    %398 = vxpose.xlu0.b32.cont [12/16] 0.0, 128
    %399 = vxpose.xlu0.b32.cont [13/16] 0.0, 128
    %400 = vxpose.xlu0.b32.cont [14/16] 0.0, 128
    %401 = vxpose.xlu0.b32.cont [15/16] 0.0, 128
    %402 = vxpose.xlu0.b32.end [16/16] 0.0, 128
    %v403 = vpop.trf.xlu0
    %v404 = vpop.trf.xlu0
    %v405 = vpop.trf.xlu0
    %v406 = vpop.trf.xlu0
    %v407 = vpop.trf.xlu0
    %v408 = vpop.trf.xlu0
    %v409 = vpop.trf.xlu0
    %v410 = vpop.trf.xlu0
    %v411 = vpop.trf.xlu0
    %v412 = vpop.trf.xlu0
    %v413 = vpop.trf.xlu0
    %v414 = vpop.trf.xlu0
    %v415 = vpop.trf.xlu0
    %v416 = vpop.trf.xlu0
    %v417 = vpop.trf.xlu0
    %v418 = vpop.trf.xlu0
    %419 = vxpose.xlu0.b32.start [1/16] %v384, 128
    %420 = vxpose.xlu0.b32.cont [2/16] 0.0, 128
    %421 = vxpose.xlu0.b32.cont [3/16] 0.0, 128
    %422 = vxpose.xlu0.b32.cont [4/16] 0.0, 128
    %423 = vxpose.xlu0.b32.cont [5/16] 0.0, 128
    %424 = vxpose.xlu0.b32.cont [6/16] 0.0, 128
    %425 = vxpose.xlu0.b32.cont [7/16] 0.0, 128
    %426 = vxpose.xlu0.b32.cont [8/16] 0.0, 128
    %427 = vxpose.xlu0.b32.cont [9/16] 0.0, 128
    %428 = vxpose.xlu0.b32.cont [10/16] 0.0, 128
    %429 = vxpose.xlu0.b32.cont [11/16] 0.0, 128
    %430 = vxpose.xlu0.b32.cont [12/16] 0.0, 128
    %431 = vxpose.xlu0.b32.cont [13/16] 0.0, 128
    %432 = vxpose.xlu0.b32.cont [14/16] 0.0, 128
    %433 = vxpose.xlu0.b32.cont [15/16] 0.0, 128
    %434 = vxpose.xlu0.b32.end [16/16] 0.0, 128
    %v435 = vpop.trf.xlu0
    %v436 = vpop.trf.xlu0
    %v437 = vpop.trf.xlu0
    %v438 = vpop.trf.xlu0
    %v439 = vpop.trf.xlu0
    %v440 = vpop.trf.xlu0
    %v441 = vpop.trf.xlu0
    %v442 = vpop.trf.xlu0
    %v443 = vpop.trf.xlu0
    %v444 = vpop.trf.xlu0
    %v445 = vpop.trf.xlu0
    %v446 = vpop.trf.xlu0
    %v447 = vpop.trf.xlu0
    %v448 = vpop.trf.xlu0
    %v449 = vpop.trf.xlu0
    %v450 = vpop.trf.xlu0
    %v451 = vld [vmem:[#allocation11] sm:$0xff]
    %v452 = vld [vmem:[%s8] sm:$0x1]
    %v454 = vperm.slane %v452, 0
    %vm456 = vcmask 64512
    %v458 = vsel %vm456, %v403, 0
    %v461 = vsel %vm456, %v404, 0
    %v464 = vsel %vm456, %v405, 0
    %v467 = vsel %vm456, %v406, 0
    %v470 = vsel %vm456, %v435, 0
    %v473 = vsel %vm456, %v436, 0
    %v476 = vsel %vm456, %v437, 0
    %v479 = vsel %vm456, %v438, 0
    %481 = vmatpush.msra.mxu0 0.0
    %482 = vmatpush.msra.mxu0 0.0
    %483 = vmatpush.msra.mxu0 0.0
    %484 = vmatpush.msra.mxu0 0.0
    %485 = vmatpush.msra.mxu0 0.0
    %486 = vmatpush.msra.mxu0 0.0
    %487 = vmatpush.msra.mxu0 0.0
    %488 = vmatpush.msra.mxu0 0.0
    %489 = vmatpush.msra.mxu0 0.0
    %490 = vmatpush.msra.mxu0 0.0
    %491 = vmatpush.msra.mxu0 0.0
    %492 = vmatpush.msra.mxu0 0.0
    %493 = vmatpush.msra.mxu0 0.0
    %494 = vmatpush.msra.mxu0 0.0
    %495 = vmatpush.msra.mxu0 0.0
    %496 = vmatpush.msra.mxu0 %v451
    %497 = vmatmul.f32.gmra.mxu0 %v458
    %v498 = vpop.f32.mrf.mxu0
    %v499 = vadd.f32 %v454, %v498
    %500 = vmatmul.f32.gmra.mxu0 %v461
    %v501 = vpop.f32.mrf.mxu0
    %v502 = vadd.f32 %v454, %v501
    %503 = vmatmul.f32.gmra.mxu0 %v464
    %v504 = vpop.f32.mrf.mxu0
    %v505 = vadd.f32 %v454, %v504
    %506 = vmatmul.f32.gmra.mxu0 %v467
    %v507 = vpop.f32.mrf.mxu0
    %v508 = vadd.f32 %v454, %v507
    %509 = vmatmul.f32.gmra.mxu0 %v470
    %v510 = vpop.f32.mrf.mxu0
    %v511 = vadd.f32 %v454, %v510
    %512 = vmatmul.f32.gmra.mxu0 %v473
    %v513 = vpop.f32.mrf.mxu0
    %v514 = vadd.f32 %v454, %v513
    %515 = vmatmul.f32.gmra.mxu0 %v476
    %v516 = vpop.f32.mrf.mxu0
    %v517 = vadd.f32 %v454, %v516
    %518 = vmatmul.f32.gmra.mxu0 %v479
    %v519 = vpop.f32.mrf.mxu0
    %v520 = vadd.f32 %v454, %v519
    %521 = vdwg.mxu0
    %v522 = vmul.f32 %v499, 0.5
    %v523 = vmul.f32 %v502, 0.5
    %v524 = vmul.f32 %v505, 0.5
    %v525 = vmul.f32 %v508, 0.5
    %v526 = vmul.f32 %v511, 0.5
    %v527 = vmul.f32 %v514, 0.5
    %v528 = vmul.f32 %v517, 0.5
    %v529 = vmul.f32 %v520, 0.5
    %v530 = vmul.f32 %v499, 0.70710677
    %v531 = vmul.f32 %v502, 0.70710677
    %v532 = vmul.f32 %v505, 0.70710677
    %v533 = vmul.f32 %v508, 0.70710677
    %v534 = vmul.f32 %v511, 0.70710677
    %v535 = vmul.f32 %v514, 0.70710677
    %v536 = vmul.f32 %v517, 0.70710677
    %v537 = vmul.f32 %v520, 0.70710677
    %v538 = vand.u32 2147483647, %v530
    %v539 = vand.u32 2147483647, %v531
    %v540 = vand.u32 2147483647, %v532
    %v541 = vand.u32 2147483647, %v533
    %v542 = vand.u32 2147483647, %v534
    %v543 = vand.u32 2147483647, %v535
    %v544 = vand.u32 2147483647, %v536
    %v545 = vand.u32 2147483647, %v537
    %v546 = vmul.f32 %v538, 0.3275911
    %v547 = vmul.f32 %v539, 0.3275911
    %v548 = vmul.f32 %v540, 0.3275911
    %v549 = vmul.f32 %v541, 0.3275911
    %v550 = vmul.f32 %v542, 0.3275911
    %v551 = vmul.f32 %v543, 0.3275911
    %v552 = vmul.f32 %v544, 0.3275911
    %v553 = vmul.f32 %v545, 0.3275911
    %v554 = vadd.f32 %v546, 1.0
    %v555 = vadd.f32 %v547, 1.0
    %v556 = vadd.f32 %v548, 1.0
    %v557 = vadd.f32 %v549, 1.0
    %v558 = vadd.f32 %v550, 1.0
    %v559 = vadd.f32 %v551, 1.0
    %v560 = vadd.f32 %v552, 1.0
    %v561 = vadd.f32 %v553, 1.0
    %v562 = vrcp.pop %v554
    %v563 = vmul.f32 %v554, %v562
    %v564 = vsub.f32 1.0, %v563
    %v565 = vmul.f32 %v562, %v564
    %v566 = vadd.f32 %v562, %v565
    %vm567 = vweird.f32 %v554
    %vm568 = vweird.f32 %v562
    %vm569 = vmor %vm567, %vm568
    %v570 = vsel %vm569, %v562, %v566
    %v571 = vand.u32 2147483647, %v554
    %vm572 = vcmp.eq.f32.partialorder %v571, 8.507059e+37
    %v573 = vand.u32 %v554, 2147483648
    %v574 = vor.u32 1.1754944e-38, %v573
    %v575 = vsel %vm572, %v574, %v570
    %v576 = vmul.f32 1.0, %v575
    %v577 = vrcp.pop %v555
    %v578 = vmul.f32 %v555, %v577
    %v579 = vsub.f32 1.0, %v578
    %v580 = vmul.f32 %v577, %v579
    %v581 = vadd.f32 %v577, %v580
    %vm582 = vweird.f32 %v555
    %vm583 = vweird.f32 %v577
    %vm584 = vmor %vm582, %vm583
    %v585 = vsel %vm584, %v577, %v581
    %v586 = vand.u32 2147483647, %v555
    %vm587 = vcmp.eq.f32.partialorder %v586, 8.507059e+37
    %v588 = vand.u32 %v555, 2147483648
    %v589 = vor.u32 1.1754944e-38, %v588
    %v590 = vsel %vm587, %v589, %v585
    %v591 = vmul.f32 1.0, %v590
    %v592 = vrcp.pop %v556
    %v593 = vmul.f32 %v556, %v592
    %v594 = vsub.f32 1.0, %v593
    %v595 = vmul.f32 %v592, %v594
    %v596 = vadd.f32 %v592, %v595
    %vm597 = vweird.f32 %v556
    %vm598 = vweird.f32 %v592
    %vm599 = vmor %vm597, %vm598
    %v600 = vsel %vm599, %v592, %v596
    %v601 = vand.u32 2147483647, %v556
    %vm602 = vcmp.eq.f32.partialorder %v601, 8.507059e+37
    %v603 = vand.u32 %v556, 2147483648
    %v604 = vor.u32 1.1754944e-38, %v603
    %v605 = vsel %vm602, %v604, %v600
    %v606 = vmul.f32 1.0, %v605
    %v607 = vrcp.pop %v557
    %v608 = vmul.f32 %v557, %v607
    %v609 = vsub.f32 1.0, %v608
    %v610 = vmul.f32 %v607, %v609
    %v611 = vadd.f32 %v607, %v610
    %vm612 = vweird.f32 %v557
    %vm613 = vweird.f32 %v607
    %vm614 = vmor %vm612, %vm613
    %v615 = vsel %vm614, %v607, %v611
    %v616 = vand.u32 2147483647, %v557
    %vm617 = vcmp.eq.f32.partialorder %v616, 8.507059e+37
    %v618 = vand.u32 %v557, 2147483648
    %v619 = vor.u32 1.1754944e-38, %v618
    %v620 = vsel %vm617, %v619, %v615
    %v621 = vmul.f32 1.0, %v620
    %v622 = vrcp.pop %v558
    %v623 = vmul.f32 %v558, %v622
    %v624 = vsub.f32 1.0, %v623
    %v625 = vmul.f32 %v622, %v624
    %v626 = vadd.f32 %v622, %v625
    %vm627 = vweird.f32 %v558
    %vm628 = vweird.f32 %v622
    %vm629 = vmor %vm627, %vm628
    %v630 = vsel %vm629, %v622, %v626
    %v631 = vand.u32 2147483647, %v558
    %vm632 = vcmp.eq.f32.partialorder %v631, 8.507059e+37
    %v633 = vand.u32 %v558, 2147483648
    %v634 = vor.u32 1.1754944e-38, %v633
    %v635 = vsel %vm632, %v634, %v630
    %v636 = vmul.f32 1.0, %v635
    %v637 = vrcp.pop %v559
    %v638 = vmul.f32 %v559, %v637
    %v639 = vsub.f32 1.0, %v638
    %v640 = vmul.f32 %v637, %v639
    %v641 = vadd.f32 %v637, %v640
    %vm642 = vweird.f32 %v559
    %vm643 = vweird.f32 %v637
    %vm644 = vmor %vm642, %vm643
    %v645 = vsel %vm644, %v637, %v641
    %v646 = vand.u32 2147483647, %v559
    %vm647 = vcmp.eq.f32.partialorder %v646, 8.507059e+37
    %v648 = vand.u32 %v559, 2147483648
    %v649 = vor.u32 1.1754944e-38, %v648
    %v650 = vsel %vm647, %v649, %v645
    %v651 = vmul.f32 1.0, %v650
    %v652 = vrcp.pop %v560
    %v653 = vmul.f32 %v560, %v652
    %v654 = vsub.f32 1.0, %v653
    %v655 = vmul.f32 %v652, %v654
    %v656 = vadd.f32 %v652, %v655
    %vm657 = vweird.f32 %v560
    %vm658 = vweird.f32 %v652
    %vm659 = vmor %vm657, %vm658
    %v660 = vsel %vm659, %v652, %v656
    %v661 = vand.u32 2147483647, %v560
    %vm662 = vcmp.eq.f32.partialorder %v661, 8.507059e+37
    %v663 = vand.u32 %v560, 2147483648
    %v664 = vor.u32 1.1754944e-38, %v663
    %v665 = vsel %vm662, %v664, %v660
    %v666 = vmul.f32 1.0, %v665
    %v667 = vrcp.pop %v561
    %v668 = vmul.f32 %v561, %v667
    %v669 = vsub.f32 1.0, %v668
    %v670 = vmul.f32 %v667, %v669
    %v671 = vadd.f32 %v667, %v670
    %vm672 = vweird.f32 %v561
    %vm673 = vweird.f32 %v667
    %vm674 = vmor %vm672, %vm673
    %v675 = vsel %vm674, %v667, %v671
    %v676 = vand.u32 2147483647, %v561
    %vm677 = vcmp.eq.f32.partialorder %v676, 8.507059e+37
    %v678 = vand.u32 %v561, 2147483648
    %v679 = vor.u32 1.1754944e-38, %v678
    %v680 = vsel %vm677, %v679, %v675
    %v681 = vmul.f32 1.0, %v680
    %v682 = vmul.f32 %v576, 1.0614054
    %v683 = vmul.f32 %v591, 1.0614054
    %v684 = vmul.f32 %v606, 1.0614054
    %v685 = vmul.f32 %v621, 1.0614054
    %v686 = vmul.f32 %v636, 1.0614054
    %v687 = vmul.f32 %v651, 1.0614054
    %v688 = vmul.f32 %v666, 1.0614054
    %v689 = vmul.f32 %v681, 1.0614054
    %v690 = vadd.f32 %v682, -1.4531521
    %v691 = vadd.f32 %v683, -1.4531521
    %v692 = vadd.f32 %v684, -1.4531521
    %v693 = vadd.f32 %v685, -1.4531521
    %v694 = vadd.f32 %v686, -1.4531521
    %v695 = vadd.f32 %v687, -1.4531521
    %v696 = vadd.f32 %v688, -1.4531521
    %v697 = vadd.f32 %v689, -1.4531521
    %v698 = vmul.f32 %v690, %v576
    %v699 = vmul.f32 %v691, %v591
    %v700 = vmul.f32 %v692, %v606
    %v701 = vmul.f32 %v693, %v621
    %v702 = vmul.f32 %v694, %v636
    %v703 = vmul.f32 %v695, %v651
    %v704 = vmul.f32 %v696, %v666
    %v705 = vmul.f32 %v697, %v681
    %v706 = vadd.f32 %v698, 1.4214138
    %v707 = vadd.f32 %v699, 1.4214138
    %v708 = vadd.f32 %v700, 1.4214138
    %v709 = vadd.f32 %v701, 1.4214138
    %v710 = vadd.f32 %v702, 1.4214138
    %v711 = vadd.f32 %v703, 1.4214138
    %v712 = vadd.f32 %v704, 1.4214138
    %v713 = vadd.f32 %v705, 1.4214138
    %v714 = vmul.f32 %v706, %v576
    %v715 = vmul.f32 %v707, %v591
    %v716 = vmul.f32 %v708, %v606
    %v717 = vmul.f32 %v709, %v621
    %v718 = vmul.f32 %v710, %v636
    %v719 = vmul.f32 %v711, %v651
    %v720 = vmul.f32 %v712, %v666
    %v721 = vmul.f32 %v713, %v681
    %v722 = vadd.f32 %v714, -0.28449672
    %v723 = vadd.f32 %v715, -0.28449672
    %v724 = vadd.f32 %v716, -0.28449672
    %v725 = vadd.f32 %v717, -0.28449672
    %v726 = vadd.f32 %v718, -0.28449672
    %v727 = vadd.f32 %v719, -0.28449672
    %v728 = vadd.f32 %v720, -0.28449672
    %v729 = vadd.f32 %v721, -0.28449672
    %v730 = vmul.f32 %v722, %v576
    %v731 = vmul.f32 %v723, %v591
    %v732 = vmul.f32 %v724, %v606
    %v733 = vmul.f32 %v725, %v621
    %v734 = vmul.f32 %v726, %v636
    %v735 = vmul.f32 %v727, %v651
    %v736 = vmul.f32 %v728, %v666
    %v737 = vmul.f32 %v729, %v681
    %v738 = vadd.f32 %v730, 0.2548296
    %v739 = vadd.f32 %v731, 0.2548296
    %v740 = vadd.f32 %v732, 0.2548296
    %v741 = vadd.f32 %v733, 0.2548296
    %v742 = vadd.f32 %v734, 0.2548296
    %v743 = vadd.f32 %v735, 0.2548296
    %v744 = vadd.f32 %v736, 0.2548296
    %v745 = vadd.f32 %v737, 0.2548296
    %v746 = vmul.f32 %v738, %v576
    %v747 = vmul.f32 %v739, %v591
    %v748 = vmul.f32 %v740, %v606
    %v749 = vmul.f32 %v741, %v621
    %v750 = vmul.f32 %v742, %v636
    %v751 = vmul.f32 %v743, %v651
    %v752 = vmul.f32 %v744, %v666
    %v753 = vmul.f32 %v745, %v681
    %v754 = vsub.f32 0.0, %v538
    %v755 = vsub.f32 0.0, %v539
    %v756 = vsub.f32 0.0, %v540
    %v757 = vsub.f32 0.0, %v541
    %v758 = vsub.f32 0.0, %v542
    %v759 = vsub.f32 0.0, %v543
    %v760 = vsub.f32 0.0, %v544
    %v761 = vsub.f32 0.0, %v545
    %v762 = vmul.f32 %v754, %v538
    %v763 = vmul.f32 %v755, %v539
    %v764 = vmul.f32 %v756, %v540
    %v765 = vmul.f32 %v757, %v541
    %v766 = vmul.f32 %v758, %v542
    %v767 = vmul.f32 %v759, %v543
    %v768 = vmul.f32 %v760, %v544
    %v769 = vmul.f32 %v761, %v545
    %v770 = vmul.f32 %v762, 1.442695
    %v771 = vpow.pop %v770
    %v772 = vmul.f32 %v763, 1.442695
    %v773 = vpow.pop %v772
    %v774 = vmul.f32 %v764, 1.442695
    %v775 = vpow.pop %v774
    %v776 = vmul.f32 %v765, 1.442695
    %v777 = vpow.pop %v776
    %v778 = vmul.f32 %v766, 1.442695
    %v779 = vpow.pop %v778
    %v780 = vmul.f32 %v767, 1.442695
    %v781 = vpow.pop %v780
    %v782 = vmul.f32 %v768, 1.442695
    %v783 = vpow.pop %v782
    %v784 = vmul.f32 %v769, 1.442695
    %v785 = vpow.pop %v784
    %v786 = vmul.f32 %v746, %v771
    %v787 = vmul.f32 %v747, %v773
    %v788 = vmul.f32 %v748, %v775
    %v789 = vmul.f32 %v749, %v777
    %v790 = vmul.f32 %v750, %v779
    %v791 = vmul.f32 %v751, %v781
    %v792 = vmul.f32 %v752, %v783
    %v793 = vmul.f32 %v753, %v785
    %v794 = vsub.f32 1.0, %v786
    %v795 = vsub.f32 1.0, %v787
    %v796 = vsub.f32 1.0, %v788
    %v797 = vsub.f32 1.0, %v789
    %v798 = vsub.f32 1.0, %v790
    %v799 = vsub.f32 1.0, %v791
    %v800 = vsub.f32 1.0, %v792
    %v801 = vsub.f32 1.0, %v793
    %vm802 = vcmp.ge.f32.partialorder %v530, 0.0
    %vm803 = vcmp.ge.f32.partialorder %v531, 0.0
    %vm804 = vcmp.ge.f32.partialorder %v532, 0.0
    %vm805 = vcmp.ge.f32.partialorder %v533, 0.0
    %vm806 = vcmp.ge.f32.partialorder %v534, 0.0
    %vm807 = vcmp.ge.f32.partialorder %v535, 0.0
    %vm808 = vcmp.ge.f32.partialorder %v536, 0.0
    %vm809 = vcmp.ge.f32.partialorder %v537, 0.0
    %v810 = vsub.f32 0.0, %v794
    %v811 = vsub.f32 0.0, %v795
    %v812 = vsub.f32 0.0, %v796
    %v813 = vsub.f32 0.0, %v797
    %v814 = vsub.f32 0.0, %v798
    %v815 = vsub.f32 0.0, %v799
    %v816 = vsub.f32 0.0, %v800
    %v817 = vsub.f32 0.0, %v801
    %v818 = vsel %vm802, %v794, %v810
    %v819 = vsel %vm803, %v795, %v811
    %v820 = vsel %vm804, %v796, %v812
    %v821 = vsel %vm805, %v797, %v813
    %v822 = vsel %vm806, %v798, %v814
    %v823 = vsel %vm807, %v799, %v815
    %v824 = vsel %vm808, %v800, %v816
    %v825 = vsel %vm809, %v801, %v817
    %v826 = vadd.f32 %v818, 1.0
    %v827 = vadd.f32 %v819, 1.0
    %v828 = vadd.f32 %v820, 1.0
    %v829 = vadd.f32 %v821, 1.0
    %v830 = vadd.f32 %v822, 1.0
    %v831 = vadd.f32 %v823, 1.0
    %v832 = vadd.f32 %v824, 1.0
    %v833 = vadd.f32 %v825, 1.0
    %v834 = vmul.f32 %v522, %v826
    %v835 = vmul.f32 %v523, %v827
    %v836 = vmul.f32 %v524, %v828
    %v837 = vmul.f32 %v525, %v829
    %v838 = vmul.f32 %v526, %v830
    %v839 = vmul.f32 %v527, %v831
    %v840 = vmul.f32 %v528, %v832
    %v841 = vmul.f32 %v529, %v833
    %v842 = vld [vmem:[%s9] sm:$0xff]
    %v843 = vld [vmem:[%s9 + $0x8] sm:$0xff]
    %v844 = vld [vmem:[%s10] sm:$0x1]
    %v846 = vperm.slane %v844, 0
    %v849 = vsel %vm133, %v834, 0
    %v852 = vsel %vm133, %v835, 0
    %v855 = vsel %vm133, %v836, 0
    %v858 = vsel %vm133, %v837, 0
    %v861 = vsel %vm133, %v838, 0
    %v864 = vsel %vm133, %v839, 0
    %v867 = vsel %vm133, %v840, 0
    %v870 = vsel %vm133, %v841, 0
    %872 = vmatpush.msra.mxu0 0.0
    %873 = vmatpush.msra.mxu0 0.0
    %874 = vmatpush.msra.mxu0 0.0
    %875 = vmatpush.msra.mxu0 0.0
    %876 = vmatpush.msra.mxu0 0.0
    %877 = vmatpush.msra.mxu0 0.0
    %878 = vmatpush.msra.mxu0 0.0
    %879 = vmatpush.msra.mxu0 0.0
    %880 = vmatpush.msra.mxu0 0.0
    %881 = vmatpush.msra.mxu0 0.0
    %882 = vmatpush.msra.mxu0 0.0
    %883 = vmatpush.msra.mxu0 0.0
    %884 = vmatpush.msra.mxu0 0.0
    %885 = vmatpush.msra.mxu0 0.0
    %886 = vmatpush.msra.mxu0 %v843
    %887 = vmatpush.msra.mxu0 %v842
    %888 = vmatmul.f32.gmra.mxu0 %v849
    %v889 = vpop.f32.mrf.mxu0
    %v890 = vadd.f32 %v846, %v889
    %891 = vmatmul.f32.gmra.mxu0 %v852
    %v892 = vpop.f32.mrf.mxu0
    %v893 = vadd.f32 %v846, %v892
    %894 = vmatmul.f32.gmra.mxu0 %v855
    %v895 = vpop.f32.mrf.mxu0
    %v896 = vadd.f32 %v846, %v895
    %897 = vmatmul.f32.gmra.mxu0 %v858
    %v898 = vpop.f32.mrf.mxu0
    %v899 = vadd.f32 %v846, %v898
    %900 = vmatmul.f32.gmra.mxu0 %v861
    %v901 = vpop.f32.mrf.mxu0
    %v902 = vadd.f32 %v846, %v901
    %903 = vmatmul.f32.gmra.mxu0 %v864
    %v904 = vpop.f32.mrf.mxu0
    %v905 = vadd.f32 %v846, %v904
    %906 = vmatmul.f32.gmra.mxu0 %v867
    %v907 = vpop.f32.mrf.mxu0
    %v908 = vadd.f32 %v846, %v907
    %909 = vmatmul.f32.gmra.mxu0 %v870
    %v910 = vpop.f32.mrf.mxu0
    %v911 = vadd.f32 %v846, %v910
    %912 = vdwg.mxu0
    %v913 = vxor.u32 %v890, 2147483648
    %v914 = vxor.u32 %v893, 2147483648
    %v915 = vxor.u32 %v896, 2147483648
    %v916 = vxor.u32 %v899, 2147483648
    %v917 = vxor.u32 %v902, 2147483648
    %v918 = vxor.u32 %v905, 2147483648
    %v919 = vxor.u32 %v908, 2147483648
    %v920 = vxor.u32 %v911, 2147483648
    %v921 = vmul.f32 %v913, 1.442695
    %v922 = vpow.pop %v921
    %v923 = vmul.f32 %v914, 1.442695
    %v924 = vpow.pop %v923
    %v925 = vmul.f32 %v915, 1.442695
    %v926 = vpow.pop %v925
    %v927 = vmul.f32 %v916, 1.442695
    %v928 = vpow.pop %v927
    %v929 = vmul.f32 %v917, 1.442695
    %v930 = vpow.pop %v929
    %v931 = vmul.f32 %v918, 1.442695
    %v932 = vpow.pop %v931
    %v933 = vmul.f32 %v919, 1.442695
    %v934 = vpow.pop %v933
    %v935 = vmul.f32 %v920, 1.442695
    %v936 = vpow.pop %v935
    %v937 = vadd.f32 %v922, 1.0
    %v938 = vadd.f32 %v924, 1.0
    %v939 = vadd.f32 %v926, 1.0
    %v940 = vadd.f32 %v928, 1.0
    %v941 = vadd.f32 %v930, 1.0
    %v942 = vadd.f32 %v932, 1.0
    %v943 = vadd.f32 %v934, 1.0
    %v944 = vadd.f32 %v936, 1.0
    %v945 = vrcp.pop %v937
    %v946 = vmul.f32 %v937, %v945
    %v947 = vsub.f32 1.0, %v946
    %v948 = vmul.f32 %v945, %v947
    %v949 = vadd.f32 %v945, %v948
    %vm950 = vweird.f32 %v937
    %vm951 = vweird.f32 %v945
    %vm952 = vmor %vm950, %vm951
    %v953 = vsel %vm952, %v945, %v949
    %v954 = vand.u32 2147483647, %v937
    %vm955 = vcmp.eq.f32.partialorder %v954, 8.507059e+37
    %v956 = vand.u32 %v937, 2147483648
    %v957 = vor.u32 1.1754944e-38, %v956
    %v958 = vsel %vm955, %v957, %v953
    %v959 = vmul.f32 1.0, %v958
    %v960 = vrcp.pop %v938
    %v961 = vmul.f32 %v938, %v960
    %v962 = vsub.f32 1.0, %v961
    %v963 = vmul.f32 %v960, %v962
    %v964 = vadd.f32 %v960, %v963
    %vm965 = vweird.f32 %v938
    %vm966 = vweird.f32 %v960
    %vm967 = vmor %vm965, %vm966
    %v968 = vsel %vm967, %v960, %v964
    %v969 = vand.u32 2147483647, %v938
    %vm970 = vcmp.eq.f32.partialorder %v969, 8.507059e+37
    %v971 = vand.u32 %v938, 2147483648
    %v972 = vor.u32 1.1754944e-38, %v971
    %v973 = vsel %vm970, %v972, %v968
    %v974 = vmul.f32 1.0, %v973
    %v975 = vrcp.pop %v939
    %v976 = vmul.f32 %v939, %v975
    %v977 = vsub.f32 1.0, %v976
    %v978 = vmul.f32 %v975, %v977
    %v979 = vadd.f32 %v975, %v978
    %vm980 = vweird.f32 %v939
    %vm981 = vweird.f32 %v975
    %vm982 = vmor %vm980, %vm981
    %v983 = vsel %vm982, %v975, %v979
    %v984 = vand.u32 2147483647, %v939
    %vm985 = vcmp.eq.f32.partialorder %v984, 8.507059e+37
    %v986 = vand.u32 %v939, 2147483648
    %v987 = vor.u32 1.1754944e-38, %v986
    %v988 = vsel %vm985, %v987, %v983
    %v989 = vmul.f32 1.0, %v988
    %v990 = vrcp.pop %v940
    %v991 = vmul.f32 %v940, %v990
    %v992 = vsub.f32 1.0, %v991
    %v993 = vmul.f32 %v990, %v992
    %v994 = vadd.f32 %v990, %v993
    %vm995 = vweird.f32 %v940
    %vm996 = vweird.f32 %v990
    %vm997 = vmor %vm995, %vm996
    %v998 = vsel %vm997, %v990, %v994
    %v999 = vand.u32 2147483647, %v940
    %vm1000 = vcmp.eq.f32.partialorder %v999, 8.507059e+37
    %v1001 = vand.u32 %v940, 2147483648
    %v1002 = vor.u32 1.1754944e-38, %v1001
    %v1003 = vsel %vm1000, %v1002, %v998
    %v1004 = vmul.f32 1.0, %v1003
    %v1005 = vrcp.pop %v941
    %v1006 = vmul.f32 %v941, %v1005
    %v1007 = vsub.f32 1.0, %v1006
    %v1008 = vmul.f32 %v1005, %v1007
    %v1009 = vadd.f32 %v1005, %v1008
    %vm1010 = vweird.f32 %v941
    %vm1011 = vweird.f32 %v1005
    %vm1012 = vmor %vm1010, %vm1011
    %v1013 = vsel %vm1012, %v1005, %v1009
    %v1014 = vand.u32 2147483647, %v941
    %vm1015 = vcmp.eq.f32.partialorder %v1014, 8.507059e+37
    %v1016 = vand.u32 %v941, 2147483648
    %v1017 = vor.u32 1.1754944e-38, %v1016
    %v1018 = vsel %vm1015, %v1017, %v1013
    %v1019 = vmul.f32 1.0, %v1018
    %v1020 = vrcp.pop %v942
    %v1021 = vmul.f32 %v942, %v1020
    %v1022 = vsub.f32 1.0, %v1021
    %v1023 = vmul.f32 %v1020, %v1022
    %v1024 = vadd.f32 %v1020, %v1023
    %vm1025 = vweird.f32 %v942
    %vm1026 = vweird.f32 %v1020
    %vm1027 = vmor %vm1025, %vm1026
    %v1028 = vsel %vm1027, %v1020, %v1024
    %v1029 = vand.u32 2147483647, %v942
    %vm1030 = vcmp.eq.f32.partialorder %v1029, 8.507059e+37
    %v1031 = vand.u32 %v942, 2147483648
    %v1032 = vor.u32 1.1754944e-38, %v1031
    %v1033 = vsel %vm1030, %v1032, %v1028
    %v1034 = vmul.f32 1.0, %v1033
    %v1035 = vrcp.pop %v943
    %v1036 = vmul.f32 %v943, %v1035
    %v1037 = vsub.f32 1.0, %v1036
    %v1038 = vmul.f32 %v1035, %v1037
    %v1039 = vadd.f32 %v1035, %v1038
    %vm1040 = vweird.f32 %v943
    %vm1041 = vweird.f32 %v1035
    %vm1042 = vmor %vm1040, %vm1041
    %v1043 = vsel %vm1042, %v1035, %v1039
    %v1044 = vand.u32 2147483647, %v943
    %vm1045 = vcmp.eq.f32.partialorder %v1044, 8.507059e+37
    %v1046 = vand.u32 %v943, 2147483648
    %v1047 = vor.u32 1.1754944e-38, %v1046
    %v1048 = vsel %vm1045, %v1047, %v1043
    %v1049 = vmul.f32 1.0, %v1048
    %v1050 = vrcp.pop %v944
    %v1051 = vmul.f32 %v944, %v1050
    %v1052 = vsub.f32 1.0, %v1051
    %v1053 = vmul.f32 %v1050, %v1052
    %v1054 = vadd.f32 %v1050, %v1053
    %vm1055 = vweird.f32 %v944
    %vm1056 = vweird.f32 %v1050
    %vm1057 = vmor %vm1055, %vm1056
    %v1058 = vsel %vm1057, %v1050, %v1054
    %v1059 = vand.u32 2147483647, %v944
    %vm1060 = vcmp.eq.f32.partialorder %v1059, 8.507059e+37
    %v1061 = vand.u32 %v944, 2147483648
    %v1062 = vor.u32 1.1754944e-38, %v1061
    %v1063 = vsel %vm1060, %v1062, %v1058
    %v1064 = vmul.f32 1.0, %v1063
    %1073 = vrot.lane.b32.xlu0 %v890, 8
    %v1074 = vpop.permute.xlu0 %1073
    %1075 = vrot.lane.b32.xlu0 %v893, 8
    %v1076 = vpop.permute.xlu0 %1075
    %1077 = vrot.lane.b32.xlu0 %v896, 8
    %v1078 = vpop.permute.xlu0 %1077
    %1079 = vrot.lane.b32.xlu0 %v899, 8
    %v1080 = vpop.permute.xlu0 %1079
    %1081 = vrot.lane.b32.xlu0 %v902, 8
    %v1082 = vpop.permute.xlu0 %1081
    %1083 = vrot.lane.b32.xlu0 %v905, 8
    %v1084 = vpop.permute.xlu0 %1083
    %1085 = vrot.lane.b32.xlu0 %v908, 8
    %v1086 = vpop.permute.xlu0 %1085
    %1087 = vrot.lane.b32.xlu0 %v911, 8
    %v1088 = vpop.permute.xlu0 %1087
    %v1097 = vmul.f32 %v959, %v1074
    %v1098 = vmul.f32 %v974, %v1076
    %v1099 = vmul.f32 %v989, %v1078
    %v1100 = vmul.f32 %v1004, %v1080
    %v1101 = vmul.f32 %v1019, %v1082
    %v1102 = vmul.f32 %v1034, %v1084
    %v1103 = vmul.f32 %v1049, %v1086
    %v1104 = vmul.f32 %v1064, %v1088
    %1105 = vrot.lane.b32.xlu0 %v403, 8
    %v1106 = vpop.permute.xlu0 %1105
    %1107 = vrot.lane.b32.xlu0 %v404, 8
    %v1108 = vpop.permute.xlu0 %1107
    %1109 = vrot.lane.b32.xlu0 %v405, 8
    %v1110 = vpop.permute.xlu0 %1109
    %1111 = vrot.lane.b32.xlu0 %v406, 8
    %v1112 = vpop.permute.xlu0 %1111
    %1113 = vrot.lane.b32.xlu0 %v435, 8
    %v1114 = vpop.permute.xlu0 %1113
    %1115 = vrot.lane.b32.xlu0 %v436, 8
    %v1116 = vpop.permute.xlu0 %1115
    %1117 = vrot.lane.b32.xlu0 %v437, 8
    %v1118 = vpop.permute.xlu0 %1117
    %1119 = vrot.lane.b32.xlu0 %v438, 8
    %v1120 = vpop.permute.xlu0 %1119
    %v1129 = vadd.f32 %v1097, %v1106
    %v1130 = vadd.f32 %v1098, %v1108
    %v1131 = vadd.f32 %v1099, %v1110
    %v1132 = vadd.f32 %v1100, %v1112
    %v1133 = vadd.f32 %v1101, %v1114
    %v1134 = vadd.f32 %v1102, %v1116
    %v1135 = vadd.f32 %v1103, %v1118
    %v1136 = vadd.f32 %v1104, %v1120
    %1145 = vrot.lane.b32.xlu0 %v1129, 120
    %v1146 = vpop.permute.xlu0 %1145
    %1147 = vrot.lane.b32.xlu0 %v1130, 120
    %v1148 = vpop.permute.xlu0 %1147
    %1149 = vrot.lane.b32.xlu0 %v1131, 120
    %v1150 = vpop.permute.xlu0 %1149
    %1151 = vrot.lane.b32.xlu0 %v1132, 120
    %v1152 = vpop.permute.xlu0 %1151
    %1153 = vrot.lane.b32.xlu0 %v1133, 120
    %v1154 = vpop.permute.xlu0 %1153
    %1155 = vrot.lane.b32.xlu0 %v1134, 120
    %v1156 = vpop.permute.xlu0 %1155
    %1157 = vrot.lane.b32.xlu0 %v1135, 120
    %v1158 = vpop.permute.xlu0 %1157
    %1159 = vrot.lane.b32.xlu0 %v1136, 120
    %v1160 = vpop.permute.xlu0 %1159
    %1169 = vxpose.xlu0.b32.start [1/16] %v1146, 128
    %1170 = vxpose.xlu0.b32.cont [2/16] %v1148, 128
    %1171 = vxpose.xlu0.b32.cont [3/16] %v1150, 128
    %1172 = vxpose.xlu0.b32.cont [4/16] %v1152, 128
    %1173 = vxpose.xlu0.b32.cont [5/16] 0.0, 128
    %1174 = vxpose.xlu0.b32.cont [6/16] 0.0, 128
    %1175 = vxpose.xlu0.b32.cont [7/16] 0.0, 128
    %1176 = vxpose.xlu0.b32.cont [8/16] 0.0, 128
    %1177 = vxpose.xlu0.b32.cont [9/16] 0.0, 128
    %1178 = vxpose.xlu0.b32.cont [10/16] 0.0, 128
    %1179 = vxpose.xlu0.b32.cont [11/16] 0.0, 128
    %1180 = vxpose.xlu0.b32.cont [12/16] 0.0, 128
    %1181 = vxpose.xlu0.b32.cont [13/16] 0.0, 128
    %1182 = vxpose.xlu0.b32.cont [14/16] 0.0, 128
    %1183 = vxpose.xlu0.b32.cont [15/16] 0.0, 128
    %1184 = vxpose.xlu0.b32.end [16/16] 0.0, 128
    %v1185 = vpop.trf.xlu0
    %v1186 = vpop.trf.xlu0
    %v1187 = vpop.trf.xlu0
    %v1188 = vpop.trf.xlu0
    %v1189 = vpop.trf.xlu0
    %v1190 = vpop.trf.xlu0
    %v1191 = vpop.trf.xlu0
    %v1192 = vpop.trf.xlu0
    %v1193 = vpop.trf.xlu0
    %v1194 = vpop.trf.xlu0
    %v1195 = vpop.trf.xlu0
    %v1196 = vpop.trf.xlu0
    %v1197 = vpop.trf.xlu0
    %v1198 = vpop.trf.xlu0
    %v1199 = vpop.trf.xlu0
    %v1200 = vpop.trf.xlu0
    %1201 = vxpose.xlu0.b32.start [1/16] %v1154, 128
    %1202 = vxpose.xlu0.b32.cont [2/16] %v1156, 128
    %1203 = vxpose.xlu0.b32.cont [3/16] %v1158, 128
    %1204 = vxpose.xlu0.b32.cont [4/16] %v1160, 128
    %1205 = vxpose.xlu0.b32.cont [5/16] 0.0, 128
    %1206 = vxpose.xlu0.b32.cont [6/16] 0.0, 128
    %1207 = vxpose.xlu0.b32.cont [7/16] 0.0, 128
    %1208 = vxpose.xlu0.b32.cont [8/16] 0.0, 128
    %1209 = vxpose.xlu0.b32.cont [9/16] 0.0, 128
    %1210 = vxpose.xlu0.b32.cont [10/16] 0.0, 128
    %1211 = vxpose.xlu0.b32.cont [11/16] 0.0, 128
    %1212 = vxpose.xlu0.b32.cont [12/16] 0.0, 128
    %1213 = vxpose.xlu0.b32.cont [13/16] 0.0, 128
    %1214 = vxpose.xlu0.b32.cont [14/16] 0.0, 128
    %1215 = vxpose.xlu0.b32.cont [15/16] 0.0, 128
    %1216 = vxpose.xlu0.b32.end [16/16] 0.0, 128
    %v1217 = vpop.trf.xlu0
    %v1218 = vpop.trf.xlu0
    %v1219 = vpop.trf.xlu0
    %v1220 = vpop.trf.xlu0
    %v1221 = vpop.trf.xlu0
    %v1222 = vpop.trf.xlu0
    %v1223 = vpop.trf.xlu0
    %v1224 = vpop.trf.xlu0
    %v1225 = vpop.trf.xlu0
    %v1226 = vpop.trf.xlu0
    %v1227 = vpop.trf.xlu0
    %v1228 = vpop.trf.xlu0
    %v1229 = vpop.trf.xlu0
    %v1230 = vpop.trf.xlu0
    %v1231 = vpop.trf.xlu0
    %v1232 = vpop.trf.xlu0
    %s1233 = scalar_lea.vmem [#allocation8], 32
    %v1234 = vld [vmem:[%s1233] sm:$0xff]
    %v1235 = vld [vmem:[%s1233 + $0x8] sm:$0xff]
    %v1236 = vld [vmem:[%s1233 + $0x10] sm:$0xff]
    %v1237 = vld [vmem:[%s1233 + $0x18] sm:$0xff]
    %s1238 = scalar_lea.vmem %s4, 1
    %v1239 = vld [vmem:[%s1238] sm:$0x1]
    %v1241 = vperm.slane %v1239, 0
    %v1244 = vsel %vm171, %v1185, 0
    %v1247 = vsel %vm171, %v1217, 0
    %1249 = vmatpush.msra.mxu0 0.0
    %1250 = vmatpush.msra.mxu0 0.0
    %1251 = vmatpush.msra.mxu0 0.0
    %1252 = vmatpush.msra.mxu0 0.0
    %1253 = vmatpush.msra.mxu0 0.0
    %1254 = vmatpush.msra.mxu0 0.0
    %1255 = vmatpush.msra.mxu0 0.0
    %1256 = vmatpush.msra.mxu0 0.0
    %1257 = vmatpush.msra.mxu0 0.0
    %1258 = vmatpush.msra.mxu0 0.0
    %1259 = vmatpush.msra.mxu0 0.0
    %1260 = vmatpush.msra.mxu0 0.0
    %1261 = vmatpush.msra.mxu0 %v1237
    %1262 = vmatpush.msra.mxu0 %v1236
    %1263 = vmatpush.msra.mxu0 %v1235
    %1264 = vmatpush.msra.mxu0 %v1234
    %1265 = vmatmul.f32.gmra.mxu0 %v1244
    %v1266 = vpop.f32.mrf.mxu0
    %v1267 = vadd.f32 %v1241, %v1266
    %1268 = vmatmul.f32.gmra.mxu0 %v1247
    %v1269 = vpop.f32.mrf.mxu0
    %v1270 = vadd.f32 %v1241, %v1269
    %1271 = vdwg.mxu0
    %v1272 = vmul.f32 %v1267, 0.5
    %v1273 = vmul.f32 %v1270, 0.5
    %v1274 = vmul.f32 %v1267, 0.70710677
    %v1275 = vmul.f32 %v1270, 0.70710677
    %v1276 = vand.u32 2147483647, %v1274
    %v1277 = vand.u32 2147483647, %v1275
    %v1278 = vmul.f32 %v1276, 0.3275911
    %v1279 = vmul.f32 %v1277, 0.3275911
    %v1280 = vadd.f32 %v1278, 1.0
    %v1281 = vadd.f32 %v1279, 1.0
    %v1282 = vrcp.pop %v1280
    %v1283 = vmul.f32 %v1280, %v1282
    %v1284 = vsub.f32 1.0, %v1283
    %v1285 = vmul.f32 %v1282, %v1284
    %v1286 = vadd.f32 %v1282, %v1285
    %vm1287 = vweird.f32 %v1280
    %vm1288 = vweird.f32 %v1282
    %vm1289 = vmor %vm1287, %vm1288
    %v1290 = vsel %vm1289, %v1282, %v1286
    %v1291 = vand.u32 2147483647, %v1280
    %vm1292 = vcmp.eq.f32.partialorder %v1291, 8.507059e+37
    %v1293 = vand.u32 %v1280, 2147483648
    %v1294 = vor.u32 1.1754944e-38, %v1293
    %v1295 = vsel %vm1292, %v1294, %v1290
    %v1296 = vmul.f32 1.0, %v1295
    %v1297 = vrcp.pop %v1281
    %v1298 = vmul.f32 %v1281, %v1297
    %v1299 = vsub.f32 1.0, %v1298
    %v1300 = vmul.f32 %v1297, %v1299
    %v1301 = vadd.f32 %v1297, %v1300
    %vm1302 = vweird.f32 %v1281
    %vm1303 = vweird.f32 %v1297
    %vm1304 = vmor %vm1302, %vm1303
    %v1305 = vsel %vm1304, %v1297, %v1301
    %v1306 = vand.u32 2147483647, %v1281
    %vm1307 = vcmp.eq.f32.partialorder %v1306, 8.507059e+37
    %v1308 = vand.u32 %v1281, 2147483648
    %v1309 = vor.u32 1.1754944e-38, %v1308
    %v1310 = vsel %vm1307, %v1309, %v1305
    %v1311 = vmul.f32 1.0, %v1310
    %v1312 = vmul.f32 %v1296, 1.0614054
    %v1313 = vmul.f32 %v1311, 1.0614054
    %v1314 = vadd.f32 %v1312, -1.4531521
    %v1315 = vadd.f32 %v1313, -1.4531521
    %v1316 = vmul.f32 %v1314, %v1296
    %v1317 = vmul.f32 %v1315, %v1311
    %v1318 = vadd.f32 %v1316, 1.4214138
    %v1319 = vadd.f32 %v1317, 1.4214138
    %v1320 = vmul.f32 %v1318, %v1296
    %v1321 = vmul.f32 %v1319, %v1311
    %v1322 = vadd.f32 %v1320, -0.28449672
    %v1323 = vadd.f32 %v1321, -0.28449672
    %v1324 = vmul.f32 %v1322, %v1296
    %v1325 = vmul.f32 %v1323, %v1311
    %v1326 = vadd.f32 %v1324, 0.2548296
    %v1327 = vadd.f32 %v1325, 0.2548296
    %v1328 = vmul.f32 %v1326, %v1296
    %v1329 = vmul.f32 %v1327, %v1311
    %v1330 = vsub.f32 0.0, %v1276
    %v1331 = vsub.f32 0.0, %v1277
    %v1332 = vmul.f32 %v1330, %v1276
    %v1333 = vmul.f32 %v1331, %v1277
    %v1334 = vmul.f32 %v1332, 1.442695
    %v1335 = vpow.pop %v1334
    %v1336 = vmul.f32 %v1333, 1.442695
    %v1337 = vpow.pop %v1336
    %v1338 = vmul.f32 %v1328, %v1335
    %v1339 = vmul.f32 %v1329, %v1337
    %v1340 = vsub.f32 1.0, %v1338
    %v1341 = vsub.f32 1.0, %v1339
    %vm1342 = vcmp.ge.f32.partialorder %v1274, 0.0
    %vm1343 = vcmp.ge.f32.partialorder %v1275, 0.0
    %v1344 = vsub.f32 0.0, %v1340
    %v1345 = vsub.f32 0.0, %v1341
    %v1346 = vsel %vm1342, %v1340, %v1344
    %v1347 = vsel %vm1343, %v1341, %v1345
    %v1348 = vadd.f32 %v1346, 1.0
    %v1349 = vadd.f32 %v1347, 1.0
    %v1350 = vmul.f32 %v1272, %v1348
    %v1351 = vmul.f32 %v1273, %v1349
    %s1352 = scalar_lea.vmem [#allocation9], 64
    %v1353 = vld [vmem:[%s1352] sm:$0xff]
    %v1354 = vld [vmem:[%s1352 + $0x8] sm:$0xff]
    %v1355 = vld [vmem:[%s1352 + $0x10] sm:$0xff]
    %v1356 = vld [vmem:[%s1352 + $0x18] sm:$0xff]
    %v1357 = vld [vmem:[%s1352 + $0x20] sm:$0xff]
    %v1358 = vld [vmem:[%s1352 + $0x28] sm:$0xff]
    %v1359 = vld [vmem:[%s1352 + $0x30] sm:$0xff]
    %v1360 = vld [vmem:[%s1352 + $0x38] sm:$0xff]
    %s1361 = scalar_lea.vmem %s6, 1
    %v1362 = vld [vmem:[%s1361] sm:$0x1]
    %v1364 = vperm.slane %v1362, 0
    %v1367 = vsel %vm293, %v1350, 0
    %v1370 = vsel %vm293, %v1351, 0
    %1372 = vmatpush.msra.mxu0 0.0
    %1373 = vmatpush.msra.mxu0 0.0
    %1374 = vmatpush.msra.mxu0 0.0
    %1375 = vmatpush.msra.mxu0 0.0
    %1376 = vmatpush.msra.mxu0 0.0
    %1377 = vmatpush.msra.mxu0 0.0
    %1378 = vmatpush.msra.mxu0 0.0
    %1379 = vmatpush.msra.mxu0 0.0
    %1380 = vmatpush.msra.mxu0 %v1360
    %1381 = vmatpush.msra.mxu0 %v1359
    %1382 = vmatpush.msra.mxu0 %v1358
    %1383 = vmatpush.msra.mxu0 %v1357
    %1384 = vmatpush.msra.mxu0 %v1356
    %1385 = vmatpush.msra.mxu0 %v1355
    %1386 = vmatpush.msra.mxu0 %v1354
    %1387 = vmatpush.msra.mxu0 %v1353
    %1388 = vmatmul.f32.gmra.mxu0 %v1367
    %v1389 = vpop.f32.mrf.mxu0
    %v1390 = vadd.f32 %v1364, %v1389
    %1391 = vmatmul.f32.gmra.mxu0 %v1370
    %v1392 = vpop.f32.mrf.mxu0
    %v1393 = vadd.f32 %v1364, %v1392
    %1394 = vdwg.mxu0
    %v1395 = vxor.u32 %v1390, 2147483648
    %v1396 = vxor.u32 %v1393, 2147483648
    %v1397 = vmul.f32 %v1395, 1.442695
    %v1398 = vpow.pop %v1397
    %v1399 = vmul.f32 %v1396, 1.442695
    %v1400 = vpow.pop %v1399
    %v1401 = vadd.f32 %v1398, 1.0
    %v1402 = vadd.f32 %v1400, 1.0
    %v1403 = vrcp.pop %v1401
    %v1404 = vmul.f32 %v1401, %v1403
    %v1405 = vsub.f32 1.0, %v1404
    %v1406 = vmul.f32 %v1403, %v1405
    %v1407 = vadd.f32 %v1403, %v1406
    %vm1408 = vweird.f32 %v1401
    %vm1409 = vweird.f32 %v1403
    %vm1410 = vmor %vm1408, %vm1409
    %v1411 = vsel %vm1410, %v1403, %v1407
    %v1412 = vand.u32 2147483647, %v1401
    %vm1413 = vcmp.eq.f32.partialorder %v1412, 8.507059e+37
    %v1414 = vand.u32 %v1401, 2147483648
    %v1415 = vor.u32 1.1754944e-38, %v1414
    %v1416 = vsel %vm1413, %v1415, %v1411
    %v1417 = vmul.f32 1.0, %v1416
    %v1418 = vrcp.pop %v1402
    %v1419 = vmul.f32 %v1402, %v1418
    %v1420 = vsub.f32 1.0, %v1419
    %v1421 = vmul.f32 %v1418, %v1420
    %v1422 = vadd.f32 %v1418, %v1421
    %vm1423 = vweird.f32 %v1402
    %vm1424 = vweird.f32 %v1418
    %vm1425 = vmor %vm1423, %vm1424
    %v1426 = vsel %vm1425, %v1418, %v1422
    %v1427 = vand.u32 2147483647, %v1402
    %vm1428 = vcmp.eq.f32.partialorder %v1427, 8.507059e+37
    %v1429 = vand.u32 %v1402, 2147483648
    %v1430 = vor.u32 1.1754944e-38, %v1429
    %v1431 = vsel %vm1428, %v1430, %v1426
    %v1432 = vmul.f32 1.0, %v1431
    %1435 = vrot.lane.b32.xlu0 %v1390, 32
    %v1436 = vpop.permute.xlu0 %1435
    %1437 = vrot.lane.b32.xlu0 %v1393, 32
    %v1438 = vpop.permute.xlu0 %1437
    %v1441 = vmul.f32 %v1417, %v1436
    %v1442 = vmul.f32 %v1432, %v1438
    %1443 = vrot.lane.b32.xlu0 %v1185, 32
    %v1444 = vpop.permute.xlu0 %1443
    %1445 = vrot.lane.b32.xlu0 %v1217, 32
    %v1446 = vpop.permute.xlu0 %1445
    %v1449 = vadd.f32 %v1441, %v1444
    %v1450 = vadd.f32 %v1442, %v1446
    %1453 = vrot.lane.b32.xlu0 %v1449, 96
    %v1454 = vpop.permute.xlu0 %1453
    %1455 = vrot.lane.b32.xlu0 %v1450, 96
    %v1456 = vpop.permute.xlu0 %1455
    %1459 = vxpose.xlu0.b32.start [1/16] %v1454, 128
    %1460 = vxpose.xlu0.b32.cont [2/16] 0.0, 128
    %1461 = vxpose.xlu0.b32.cont [3/16] 0.0, 128
    %1462 = vxpose.xlu0.b32.cont [4/16] 0.0, 128
    %1463 = vxpose.xlu0.b32.cont [5/16] 0.0, 128
    %1464 = vxpose.xlu0.b32.cont [6/16] 0.0, 128
    %1465 = vxpose.xlu0.b32.cont [7/16] 0.0, 128
    %1466 = vxpose.xlu0.b32.cont [8/16] 0.0, 128
    %1467 = vxpose.xlu0.b32.cont [9/16] 0.0, 128
    %1468 = vxpose.xlu0.b32.cont [10/16] 0.0, 128
    %1469 = vxpose.xlu0.b32.cont [11/16] 0.0, 128
    %1470 = vxpose.xlu0.b32.cont [12/16] 0.0, 128
    %1471 = vxpose.xlu0.b32.cont [13/16] 0.0, 128
    %1472 = vxpose.xlu0.b32.cont [14/16] 0.0, 128
    %1473 = vxpose.xlu0.b32.cont [15/16] 0.0, 128
    %1474 = vxpose.xlu0.b32.end [16/16] 0.0, 128
    %v1475 = vpop.trf.xlu0
    %v1476 = vpop.trf.xlu0
    %v1477 = vpop.trf.xlu0
    %v1478 = vpop.trf.xlu0
    %v1479 = vpop.trf.xlu0
    %v1480 = vpop.trf.xlu0
    %v1481 = vpop.trf.xlu0
    %v1482 = vpop.trf.xlu0
    %v1483 = vpop.trf.xlu0
    %v1484 = vpop.trf.xlu0
    %v1485 = vpop.trf.xlu0
    %v1486 = vpop.trf.xlu0
    %v1487 = vpop.trf.xlu0
    %v1488 = vpop.trf.xlu0
    %v1489 = vpop.trf.xlu0
    %v1490 = vpop.trf.xlu0
    %1491 = vxpose.xlu0.b32.start [1/16] %v1456, 128
    %1492 = vxpose.xlu0.b32.cont [2/16] 0.0, 128
    %1493 = vxpose.xlu0.b32.cont [3/16] 0.0, 128
    %1494 = vxpose.xlu0.b32.cont [4/16] 0.0, 128
    %1495 = vxpose.xlu0.b32.cont [5/16] 0.0, 128
    %1496 = vxpose.xlu0.b32.cont [6/16] 0.0, 128
    %1497 = vxpose.xlu0.b32.cont [7/16] 0.0, 128
    %1498 = vxpose.xlu0.b32.cont [8/16] 0.0, 128
    %1499 = vxpose.xlu0.b32.cont [9/16] 0.0, 128
    %1500 = vxpose.xlu0.b32.cont [10/16] 0.0, 128
    %1501 = vxpose.xlu0.b32.cont [11/16] 0.0, 128
    %1502 = vxpose.xlu0.b32.cont [12/16] 0.0, 128
    %1503 = vxpose.xlu0.b32.cont [13/16] 0.0, 128
    %1504 = vxpose.xlu0.b32.cont [14/16] 0.0, 128
    %1505 = vxpose.xlu0.b32.cont [15/16] 0.0, 128
    %1506 = vxpose.xlu0.b32.end [16/16] 0.0, 128
    %v1507 = vpop.trf.xlu0
    %v1508 = vpop.trf.xlu0
    %v1509 = vpop.trf.xlu0
    %v1510 = vpop.trf.xlu0
    %v1511 = vpop.trf.xlu0
    %v1512 = vpop.trf.xlu0
    %v1513 = vpop.trf.xlu0
    %v1514 = vpop.trf.xlu0
    %v1515 = vpop.trf.xlu0
    %v1516 = vpop.trf.xlu0
    %v1517 = vpop.trf.xlu0
    %v1518 = vpop.trf.xlu0
    %v1519 = vpop.trf.xlu0
    %v1520 = vpop.trf.xlu0
    %v1521 = vpop.trf.xlu0
    %v1522 = vpop.trf.xlu0
    %s1523 = scalar_lea.vmem [#allocation11], 8
    %v1524 = vld [vmem:[%s1523] sm:$0xff]
    %s1525 = scalar_lea.vmem %s8, 1
    %v1526 = vld [vmem:[%s1525] sm:$0x1]
    %v1528 = vperm.slane %v1526, 0
    %v1531 = vsel %vm456, %v1475, 0
    %v1534 = vsel %vm456, %v1476, 0
    %v1537 = vsel %vm456, %v1477, 0
    %v1540 = vsel %vm456, %v1478, 0
    %v1543 = vsel %vm456, %v1507, 0
    %v1546 = vsel %vm456, %v1508, 0
    %v1549 = vsel %vm456, %v1509, 0
    %v1552 = vsel %vm456, %v1510, 0
    %1554 = vmatpush.msra.mxu0 0.0
    %1555 = vmatpush.msra.mxu0 0.0
    %1556 = vmatpush.msra.mxu0 0.0
    %1557 = vmatpush.msra.mxu0 0.0
    %1558 = vmatpush.msra.mxu0 0.0
    %1559 = vmatpush.msra.mxu0 0.0
    %1560 = vmatpush.msra.mxu0 0.0
    %1561 = vmatpush.msra.mxu0 0.0
    %1562 = vmatpush.msra.mxu0 0.0
    %1563 = vmatpush.msra.mxu0 0.0
    %1564 = vmatpush.msra.mxu0 0.0
    %1565 = vmatpush.msra.mxu0 0.0
    %1566 = vmatpush.msra.mxu0 0.0
    %1567 = vmatpush.msra.mxu0 0.0
    %1568 = vmatpush.msra.mxu0 0.0
    %1569 = vmatpush.msra.mxu0 %v1524
    %1570 = vmatmul.f32.gmra.mxu0 %v1531
    %v1571 = vpop.f32.mrf.mxu0
    %v1572 = vadd.f32 %v1528, %v1571
    %1573 = vmatmul.f32.gmra.mxu0 %v1534
    %v1574 = vpop.f32.mrf.mxu0
    %v1575 = vadd.f32 %v1528, %v1574
    %1576 = vmatmul.f32.gmra.mxu0 %v1537
    %v1577 = vpop.f32.mrf.mxu0
    %v1578 = vadd.f32 %v1528, %v1577
    %1579 = vmatmul.f32.gmra.mxu0 %v1540
    %v1580 = vpop.f32.mrf.mxu0
    %v1581 = vadd.f32 %v1528, %v1580
    %1582 = vmatmul.f32.gmra.mxu0 %v1543
    %v1583 = vpop.f32.mrf.mxu0
    %v1584 = vadd.f32 %v1528, %v1583
    %1585 = vmatmul.f32.gmra.mxu0 %v1546
    %v1586 = vpop.f32.mrf.mxu0
    %v1587 = vadd.f32 %v1528, %v1586
    %1588 = vmatmul.f32.gmra.mxu0 %v1549
    %v1589 = vpop.f32.mrf.mxu0
    %v1590 = vadd.f32 %v1528, %v1589
    %1591 = vmatmul.f32.gmra.mxu0 %v1552
    %v1592 = vpop.f32.mrf.mxu0
    %v1593 = vadd.f32 %v1528, %v1592
    %1594 = vdwg.mxu0
    %v1595 = vmul.f32 %v1572, 0.5
    %v1596 = vmul.f32 %v1575, 0.5
    %v1597 = vmul.f32 %v1578, 0.5
    %v1598 = vmul.f32 %v1581, 0.5
    %v1599 = vmul.f32 %v1584, 0.5
    %v1600 = vmul.f32 %v1587, 0.5
    %v1601 = vmul.f32 %v1590, 0.5
    %v1602 = vmul.f32 %v1593, 0.5
    %v1603 = vmul.f32 %v1572, 0.70710677
    %v1604 = vmul.f32 %v1575, 0.70710677
    %v1605 = vmul.f32 %v1578, 0.70710677
    %v1606 = vmul.f32 %v1581, 0.70710677
    %v1607 = vmul.f32 %v1584, 0.70710677
    %v1608 = vmul.f32 %v1587, 0.70710677
    %v1609 = vmul.f32 %v1590, 0.70710677
    %v1610 = vmul.f32 %v1593, 0.70710677
    %v1611 = vand.u32 2147483647, %v1603
    %v1612 = vand.u32 2147483647, %v1604
    %v1613 = vand.u32 2147483647, %v1605
    %v1614 = vand.u32 2147483647, %v1606
    %v1615 = vand.u32 2147483647, %v1607
    %v1616 = vand.u32 2147483647, %v1608
    %v1617 = vand.u32 2147483647, %v1609
    %v1618 = vand.u32 2147483647, %v1610
    %v1619 = vmul.f32 %v1611, 0.3275911
    %v1620 = vmul.f32 %v1612, 0.3275911
    %v1621 = vmul.f32 %v1613, 0.3275911
    %v1622 = vmul.f32 %v1614, 0.3275911
    %v1623 = vmul.f32 %v1615, 0.3275911
    %v1624 = vmul.f32 %v1616, 0.3275911
    %v1625 = vmul.f32 %v1617, 0.3275911
    %v1626 = vmul.f32 %v1618, 0.3275911
    %v1627 = vadd.f32 %v1619, 1.0
    %v1628 = vadd.f32 %v1620, 1.0
    %v1629 = vadd.f32 %v1621, 1.0
    %v1630 = vadd.f32 %v1622, 1.0
    %v1631 = vadd.f32 %v1623, 1.0
    %v1632 = vadd.f32 %v1624, 1.0
    %v1633 = vadd.f32 %v1625, 1.0
    %v1634 = vadd.f32 %v1626, 1.0
    %v1635 = vrcp.pop %v1627
    %v1636 = vmul.f32 %v1627, %v1635
    %v1637 = vsub.f32 1.0, %v1636
    %v1638 = vmul.f32 %v1635, %v1637
    %v1639 = vadd.f32 %v1635, %v1638
    %vm1640 = vweird.f32 %v1627
    %vm1641 = vweird.f32 %v1635
    %vm1642 = vmor %vm1640, %vm1641
    %v1643 = vsel %vm1642, %v1635, %v1639
    %v1644 = vand.u32 2147483647, %v1627
    %vm1645 = vcmp.eq.f32.partialorder %v1644, 8.507059e+37
    %v1646 = vand.u32 %v1627, 2147483648
    %v1647 = vor.u32 1.1754944e-38, %v1646
    %v1648 = vsel %vm1645, %v1647, %v1643
    %v1649 = vmul.f32 1.0, %v1648
    %v1650 = vrcp.pop %v1628
    %v1651 = vmul.f32 %v1628, %v1650
    %v1652 = vsub.f32 1.0, %v1651
    %v1653 = vmul.f32 %v1650, %v1652
    %v1654 = vadd.f32 %v1650, %v1653
    %vm1655 = vweird.f32 %v1628
    %vm1656 = vweird.f32 %v1650
    %vm1657 = vmor %vm1655, %vm1656
    %v1658 = vsel %vm1657, %v1650, %v1654
    %v1659 = vand.u32 2147483647, %v1628
    %vm1660 = vcmp.eq.f32.partialorder %v1659, 8.507059e+37
    %v1661 = vand.u32 %v1628, 2147483648
    %v1662 = vor.u32 1.1754944e-38, %v1661
    %v1663 = vsel %vm1660, %v1662, %v1658
    %v1664 = vmul.f32 1.0, %v1663
    %v1665 = vrcp.pop %v1629
    %v1666 = vmul.f32 %v1629, %v1665
    %v1667 = vsub.f32 1.0, %v1666
    %v1668 = vmul.f32 %v1665, %v1667
    %v1669 = vadd.f32 %v1665, %v1668
    %vm1670 = vweird.f32 %v1629
    %vm1671 = vweird.f32 %v1665
    %vm1672 = vmor %vm1670, %vm1671
    %v1673 = vsel %vm1672, %v1665, %v1669
    %v1674 = vand.u32 2147483647, %v1629
    %vm1675 = vcmp.eq.f32.partialorder %v1674, 8.507059e+37
    %v1676 = vand.u32 %v1629, 2147483648
    %v1677 = vor.u32 1.1754944e-38, %v1676
    %v1678 = vsel %vm1675, %v1677, %v1673
    %v1679 = vmul.f32 1.0, %v1678
    %v1680 = vrcp.pop %v1630
    %v1681 = vmul.f32 %v1630, %v1680
    %v1682 = vsub.f32 1.0, %v1681
    %v1683 = vmul.f32 %v1680, %v1682
    %v1684 = vadd.f32 %v1680, %v1683
    %vm1685 = vweird.f32 %v1630
    %vm1686 = vweird.f32 %v1680
    %vm1687 = vmor %vm1685, %vm1686
    %v1688 = vsel %vm1687, %v1680, %v1684
    %v1689 = vand.u32 2147483647, %v1630
    %vm1690 = vcmp.eq.f32.partialorder %v1689, 8.507059e+37
    %v1691 = vand.u32 %v1630, 2147483648
    %v1692 = vor.u32 1.1754944e-38, %v1691
    %v1693 = vsel %vm1690, %v1692, %v1688
    %v1694 = vmul.f32 1.0, %v1693
    %v1695 = vrcp.pop %v1631
    %v1696 = vmul.f32 %v1631, %v1695
    %v1697 = vsub.f32 1.0, %v1696
    %v1698 = vmul.f32 %v1695, %v1697
    %v1699 = vadd.f32 %v1695, %v1698
    %vm1700 = vweird.f32 %v1631
    %vm1701 = vweird.f32 %v1695
    %vm1702 = vmor %vm1700, %vm1701
    %v1703 = vsel %vm1702, %v1695, %v1699
    %v1704 = vand.u32 2147483647, %v1631
    %vm1705 = vcmp.eq.f32.partialorder %v1704, 8.507059e+37
    %v1706 = vand.u32 %v1631, 2147483648
    %v1707 = vor.u32 1.1754944e-38, %v1706
    %v1708 = vsel %vm1705, %v1707, %v1703
    %v1709 = vmul.f32 1.0, %v1708
    %v1710 = vrcp.pop %v1632
    %v1711 = vmul.f32 %v1632, %v1710
    %v1712 = vsub.f32 1.0, %v1711
    %v1713 = vmul.f32 %v1710, %v1712
    %v1714 = vadd.f32 %v1710, %v1713
    %vm1715 = vweird.f32 %v1632
    %vm1716 = vweird.f32 %v1710
    %vm1717 = vmor %vm1715, %vm1716
    %v1718 = vsel %vm1717, %v1710, %v1714
    %v1719 = vand.u32 2147483647, %v1632
    %vm1720 = vcmp.eq.f32.partialorder %v1719, 8.507059e+37
    %v1721 = vand.u32 %v1632, 2147483648
    %v1722 = vor.u32 1.1754944e-38, %v1721
    %v1723 = vsel %vm1720, %v1722, %v1718
    %v1724 = vmul.f32 1.0, %v1723
    %v1725 = vrcp.pop %v1633
    %v1726 = vmul.f32 %v1633, %v1725
    %v1727 = vsub.f32 1.0, %v1726
    %v1728 = vmul.f32 %v1725, %v1727
    %v1729 = vadd.f32 %v1725, %v1728
    %vm1730 = vweird.f32 %v1633
    %vm1731 = vweird.f32 %v1725
    %vm1732 = vmor %vm1730, %vm1731
    %v1733 = vsel %vm1732, %v1725, %v1729
    %v1734 = vand.u32 2147483647, %v1633
    %vm1735 = vcmp.eq.f32.partialorder %v1734, 8.507059e+37
    %v1736 = vand.u32 %v1633, 2147483648
    %v1737 = vor.u32 1.1754944e-38, %v1736
    %v1738 = vsel %vm1735, %v1737, %v1733
    %v1739 = vmul.f32 1.0, %v1738
    %v1740 = vrcp.pop %v1634
    %v1741 = vmul.f32 %v1634, %v1740
    %v1742 = vsub.f32 1.0, %v1741
    %v1743 = vmul.f32 %v1740, %v1742
    %v1744 = vadd.f32 %v1740, %v1743
    %vm1745 = vweird.f32 %v1634
    %vm1746 = vweird.f32 %v1740
    %vm1747 = vmor %vm1745, %vm1746
    %v1748 = vsel %vm1747, %v1740, %v1744
    %v1749 = vand.u32 2147483647, %v1634
    %vm1750 = vcmp.eq.f32.partialorder %v1749, 8.507059e+37
    %v1751 = vand.u32 %v1634, 2147483648
    %v1752 = vor.u32 1.1754944e-38, %v1751
    %v1753 = vsel %vm1750, %v1752, %v1748
    %v1754 = vmul.f32 1.0, %v1753
    %v1755 = vmul.f32 %v1649, 1.0614054
    %v1756 = vmul.f32 %v1664, 1.0614054
    %v1757 = vmul.f32 %v1679, 1.0614054
    %v1758 = vmul.f32 %v1694, 1.0614054
    %v1759 = vmul.f32 %v1709, 1.0614054
    %v1760 = vmul.f32 %v1724, 1.0614054
    %v1761 = vmul.f32 %v1739, 1.0614054
    %v1762 = vmul.f32 %v1754, 1.0614054
    %v1763 = vadd.f32 %v1755, -1.4531521
    %v1764 = vadd.f32 %v1756, -1.4531521
    %v1765 = vadd.f32 %v1757, -1.4531521
    %v1766 = vadd.f32 %v1758, -1.4531521
    %v1767 = vadd.f32 %v1759, -1.4531521
    %v1768 = vadd.f32 %v1760, -1.4531521
    %v1769 = vadd.f32 %v1761, -1.4531521
    %v1770 = vadd.f32 %v1762, -1.4531521
    %v1771 = vmul.f32 %v1763, %v1649
    %v1772 = vmul.f32 %v1764, %v1664
    %v1773 = vmul.f32 %v1765, %v1679
    %v1774 = vmul.f32 %v1766, %v1694
    %v1775 = vmul.f32 %v1767, %v1709
    %v1776 = vmul.f32 %v1768, %v1724
    %v1777 = vmul.f32 %v1769, %v1739
    %v1778 = vmul.f32 %v1770, %v1754
    %v1779 = vadd.f32 %v1771, 1.4214138
    %v1780 = vadd.f32 %v1772, 1.4214138
    %v1781 = vadd.f32 %v1773, 1.4214138
    %v1782 = vadd.f32 %v1774, 1.4214138
    %v1783 = vadd.f32 %v1775, 1.4214138
    %v1784 = vadd.f32 %v1776, 1.4214138
    %v1785 = vadd.f32 %v1777, 1.4214138
    %v1786 = vadd.f32 %v1778, 1.4214138
    %v1787 = vmul.f32 %v1779, %v1649
    %v1788 = vmul.f32 %v1780, %v1664
    %v1789 = vmul.f32 %v1781, %v1679
    %v1790 = vmul.f32 %v1782, %v1694
    %v1791 = vmul.f32 %v1783, %v1709
    %v1792 = vmul.f32 %v1784, %v1724
    %v1793 = vmul.f32 %v1785, %v1739
    %v1794 = vmul.f32 %v1786, %v1754
    %v1795 = vadd.f32 %v1787, -0.28449672
    %v1796 = vadd.f32 %v1788, -0.28449672
    %v1797 = vadd.f32 %v1789, -0.28449672
    %v1798 = vadd.f32 %v1790, -0.28449672
    %v1799 = vadd.f32 %v1791, -0.28449672
    %v1800 = vadd.f32 %v1792, -0.28449672
    %v1801 = vadd.f32 %v1793, -0.28449672
    %v1802 = vadd.f32 %v1794, -0.28449672
    %v1803 = vmul.f32 %v1795, %v1649
    %v1804 = vmul.f32 %v1796, %v1664
    %v1805 = vmul.f32 %v1797, %v1679
    %v1806 = vmul.f32 %v1798, %v1694
    %v1807 = vmul.f32 %v1799, %v1709
    %v1808 = vmul.f32 %v1800, %v1724
    %v1809 = vmul.f32 %v1801, %v1739
    %v1810 = vmul.f32 %v1802, %v1754
    %v1811 = vadd.f32 %v1803, 0.2548296
    %v1812 = vadd.f32 %v1804, 0.2548296
    %v1813 = vadd.f32 %v1805, 0.2548296
    %v1814 = vadd.f32 %v1806, 0.2548296
    %v1815 = vadd.f32 %v1807, 0.2548296
    %v1816 = vadd.f32 %v1808, 0.2548296
    %v1817 = vadd.f32 %v1809, 0.2548296
    %v1818 = vadd.f32 %v1810, 0.2548296
    %v1819 = vmul.f32 %v1811, %v1649
    %v1820 = vmul.f32 %v1812, %v1664
    %v1821 = vmul.f32 %v1813, %v1679
    %v1822 = vmul.f32 %v1814, %v1694
    %v1823 = vmul.f32 %v1815, %v1709
    %v1824 = vmul.f32 %v1816, %v1724
    %v1825 = vmul.f32 %v1817, %v1739
    %v1826 = vmul.f32 %v1818, %v1754
    %v1827 = vsub.f32 0.0, %v1611
    %v1828 = vsub.f32 0.0, %v1612
    %v1829 = vsub.f32 0.0, %v1613
    %v1830 = vsub.f32 0.0, %v1614
    %v1831 = vsub.f32 0.0, %v1615
    %v1832 = vsub.f32 0.0, %v1616
    %v1833 = vsub.f32 0.0, %v1617
    %v1834 = vsub.f32 0.0, %v1618
    %v1835 = vmul.f32 %v1827, %v1611
    %v1836 = vmul.f32 %v1828, %v1612
    %v1837 = vmul.f32 %v1829, %v1613
    %v1838 = vmul.f32 %v1830, %v1614
    %v1839 = vmul.f32 %v1831, %v1615
    %v1840 = vmul.f32 %v1832, %v1616
    %v1841 = vmul.f32 %v1833, %v1617
    %v1842 = vmul.f32 %v1834, %v1618
    %v1843 = vmul.f32 %v1835, 1.442695
    %v1844 = vpow.pop %v1843
    %v1845 = vmul.f32 %v1836, 1.442695
    %v1846 = vpow.pop %v1845
    %v1847 = vmul.f32 %v1837, 1.442695
    %v1848 = vpow.pop %v1847
    %v1849 = vmul.f32 %v1838, 1.442695
    %v1850 = vpow.pop %v1849
    %v1851 = vmul.f32 %v1839, 1.442695
    %v1852 = vpow.pop %v1851
    %v1853 = vmul.f32 %v1840, 1.442695
    %v1854 = vpow.pop %v1853
    %v1855 = vmul.f32 %v1841, 1.442695
    %v1856 = vpow.pop %v1855
    %v1857 = vmul.f32 %v1842, 1.442695
    %v1858 = vpow.pop %v1857
    %v1859 = vmul.f32 %v1819, %v1844
    %v1860 = vmul.f32 %v1820, %v1846
    %v1861 = vmul.f32 %v1821, %v1848
    %v1862 = vmul.f32 %v1822, %v1850
    %v1863 = vmul.f32 %v1823, %v1852
    %v1864 = vmul.f32 %v1824, %v1854
    %v1865 = vmul.f32 %v1825, %v1856
    %v1866 = vmul.f32 %v1826, %v1858
    %v1867 = vsub.f32 1.0, %v1859
    %v1868 = vsub.f32 1.0, %v1860
    %v1869 = vsub.f32 1.0, %v1861
    %v1870 = vsub.f32 1.0, %v1862
    %v1871 = vsub.f32 1.0, %v1863
    %v1872 = vsub.f32 1.0, %v1864
    %v1873 = vsub.f32 1.0, %v1865
    %v1874 = vsub.f32 1.0, %v1866
    %vm1875 = vcmp.ge.f32.partialorder %v1603, 0.0
    %vm1876 = vcmp.ge.f32.partialorder %v1604, 0.0
    %vm1877 = vcmp.ge.f32.partialorder %v1605, 0.0
    %vm1878 = vcmp.ge.f32.partialorder %v1606, 0.0
    %vm1879 = vcmp.ge.f32.partialorder %v1607, 0.0
    %vm1880 = vcmp.ge.f32.partialorder %v1608, 0.0
    %vm1881 = vcmp.ge.f32.partialorder %v1609, 0.0
    %vm1882 = vcmp.ge.f32.partialorder %v1610, 0.0
    %v1883 = vsub.f32 0.0, %v1867
    %v1884 = vsub.f32 0.0, %v1868
    %v1885 = vsub.f32 0.0, %v1869
    %v1886 = vsub.f32 0.0, %v1870
    %v1887 = vsub.f32 0.0, %v1871
    %v1888 = vsub.f32 0.0, %v1872
    %v1889 = vsub.f32 0.0, %v1873
    %v1890 = vsub.f32 0.0, %v1874
    %v1891 = vsel %vm1875, %v1867, %v1883
    %v1892 = vsel %vm1876, %v1868, %v1884
    %v1893 = vsel %vm1877, %v1869, %v1885
    %v1894 = vsel %vm1878, %v1870, %v1886
    %v1895 = vsel %vm1879, %v1871, %v1887
    %v1896 = vsel %vm1880, %v1872, %v1888
    %v1897 = vsel %vm1881, %v1873, %v1889
    %v1898 = vsel %vm1882, %v1874, %v1890
    %v1899 = vadd.f32 %v1891, 1.0
    %v1900 = vadd.f32 %v1892, 1.0
    %v1901 = vadd.f32 %v1893, 1.0
    %v1902 = vadd.f32 %v1894, 1.0
    %v1903 = vadd.f32 %v1895, 1.0
    %v1904 = vadd.f32 %v1896, 1.0
    %v1905 = vadd.f32 %v1897, 1.0
    %v1906 = vadd.f32 %v1898, 1.0
    %v1907 = vmul.f32 %v1595, %v1899
    %v1908 = vmul.f32 %v1596, %v1900
    %v1909 = vmul.f32 %v1597, %v1901
    %v1910 = vmul.f32 %v1598, %v1902
    %v1911 = vmul.f32 %v1599, %v1903
    %v1912 = vmul.f32 %v1600, %v1904
    %v1913 = vmul.f32 %v1601, %v1905
    %v1914 = vmul.f32 %v1602, %v1906
    %s1915 = scalar_lea.vmem %s9, 16
    %v1916 = vld [vmem:[%s1915] sm:$0xff]
    %v1917 = vld [vmem:[%s1915 + $0x8] sm:$0xff]
    %s1918 = scalar_lea.vmem %s10, 1
    %v1919 = vld [vmem:[%s1918] sm:$0x1]
    %v1921 = vperm.slane %v1919, 0
    %v1924 = vsel %vm133, %v1907, 0
    %v1927 = vsel %vm133, %v1908, 0
    %v1930 = vsel %vm133, %v1909, 0
    %v1933 = vsel %vm133, %v1910, 0
    %v1936 = vsel %vm133, %v1911, 0
    %v1939 = vsel %vm133, %v1912, 0
    %v1942 = vsel %vm133, %v1913, 0
    %v1945 = vsel %vm133, %v1914, 0
    %1947 = vmatpush.msra.mxu0 0.0
    %1948 = vmatpush.msra.mxu0 0.0
    %1949 = vmatpush.msra.mxu0 0.0
    %1950 = vmatpush.msra.mxu0 0.0
    %1951 = vmatpush.msra.mxu0 0.0
    %1952 = vmatpush.msra.mxu0 0.0
    %1953 = vmatpush.msra.mxu0 0.0
    %1954 = vmatpush.msra.mxu0 0.0
    %1955 = vmatpush.msra.mxu0 0.0
    %1956 = vmatpush.msra.mxu0 0.0
    %1957 = vmatpush.msra.mxu0 0.0
    %1958 = vmatpush.msra.mxu0 0.0
    %1959 = vmatpush.msra.mxu0 0.0
    %1960 = vmatpush.msra.mxu0 0.0
    %1961 = vmatpush.msra.mxu0 %v1917
    %1962 = vmatpush.msra.mxu0 %v1916
    %1963 = vmatmul.f32.gmra.mxu0 %v1924
    %v1964 = vpop.f32.mrf.mxu0
    %v1965 = vadd.f32 %v1921, %v1964
    %1966 = vmatmul.f32.gmra.mxu0 %v1927
    %v1967 = vpop.f32.mrf.mxu0
    %v1968 = vadd.f32 %v1921, %v1967
    %1969 = vmatmul.f32.gmra.mxu0 %v1930
    %v1970 = vpop.f32.mrf.mxu0
    %v1971 = vadd.f32 %v1921, %v1970
    %1972 = vmatmul.f32.gmra.mxu0 %v1933
    %v1973 = vpop.f32.mrf.mxu0
    %v1974 = vadd.f32 %v1921, %v1973
    %1975 = vmatmul.f32.gmra.mxu0 %v1936
    %v1976 = vpop.f32.mrf.mxu0
    %v1977 = vadd.f32 %v1921, %v1976
    %1978 = vmatmul.f32.gmra.mxu0 %v1939
    %v1979 = vpop.f32.mrf.mxu0
    %v1980 = vadd.f32 %v1921, %v1979
    %1981 = vmatmul.f32.gmra.mxu0 %v1942
    %v1982 = vpop.f32.mrf.mxu0
    %v1983 = vadd.f32 %v1921, %v1982
    %1984 = vmatmul.f32.gmra.mxu0 %v1945
    %v1985 = vpop.f32.mrf.mxu0
    %v1986 = vadd.f32 %v1921, %v1985
    %1987 = vdwg.mxu0
    %v1988 = vxor.u32 %v1965, 2147483648
    %v1989 = vxor.u32 %v1968, 2147483648
    %v1990 = vxor.u32 %v1971, 2147483648
    %v1991 = vxor.u32 %v1974, 2147483648
    %v1992 = vxor.u32 %v1977, 2147483648
    %v1993 = vxor.u32 %v1980, 2147483648
    %v1994 = vxor.u32 %v1983, 2147483648
    %v1995 = vxor.u32 %v1986, 2147483648
    %v1996 = vmul.f32 %v1988, 1.442695
    %v1997 = vpow.pop %v1996
    %v1998 = vmul.f32 %v1989, 1.442695
    %v1999 = vpow.pop %v1998
    %v2000 = vmul.f32 %v1990, 1.442695
    %v2001 = vpow.pop %v2000
    %v2002 = vmul.f32 %v1991, 1.442695
    %v2003 = vpow.pop %v2002
    %v2004 = vmul.f32 %v1992, 1.442695
    %v2005 = vpow.pop %v2004
    %v2006 = vmul.f32 %v1993, 1.442695
    %v2007 = vpow.pop %v2006
    %v2008 = vmul.f32 %v1994, 1.442695
    %v2009 = vpow.pop %v2008
    %v2010 = vmul.f32 %v1995, 1.442695
    %v2011 = vpow.pop %v2010
    %v2012 = vadd.f32 %v1997, 1.0
    %v2013 = vadd.f32 %v1999, 1.0
    %v2014 = vadd.f32 %v2001, 1.0
    %v2015 = vadd.f32 %v2003, 1.0
    %v2016 = vadd.f32 %v2005, 1.0
    %v2017 = vadd.f32 %v2007, 1.0
    %v2018 = vadd.f32 %v2009, 1.0
    %v2019 = vadd.f32 %v2011, 1.0
    %v2020 = vrcp.pop %v2012
    %v2021 = vmul.f32 %v2012, %v2020
    %v2022 = vsub.f32 1.0, %v2021
    %v2023 = vmul.f32 %v2020, %v2022
    %v2024 = vadd.f32 %v2020, %v2023
    %vm2025 = vweird.f32 %v2012
    %vm2026 = vweird.f32 %v2020
    %vm2027 = vmor %vm2025, %vm2026
    %v2028 = vsel %vm2027, %v2020, %v2024
    %v2029 = vand.u32 2147483647, %v2012
    %vm2030 = vcmp.eq.f32.partialorder %v2029, 8.507059e+37
    %v2031 = vand.u32 %v2012, 2147483648
    %v2032 = vor.u32 1.1754944e-38, %v2031
    %v2033 = vsel %vm2030, %v2032, %v2028
    %v2034 = vmul.f32 1.0, %v2033
    %v2035 = vrcp.pop %v2013
    %v2036 = vmul.f32 %v2013, %v2035
    %v2037 = vsub.f32 1.0, %v2036
    %v2038 = vmul.f32 %v2035, %v2037
    %v2039 = vadd.f32 %v2035, %v2038
    %vm2040 = vweird.f32 %v2013
    %vm2041 = vweird.f32 %v2035
    %vm2042 = vmor %vm2040, %vm2041
    %v2043 = vsel %vm2042, %v2035, %v2039
    %v2044 = vand.u32 2147483647, %v2013
    %vm2045 = vcmp.eq.f32.partialorder %v2044, 8.507059e+37
    %v2046 = vand.u32 %v2013, 2147483648
    %v2047 = vor.u32 1.1754944e-38, %v2046
    %v2048 = vsel %vm2045, %v2047, %v2043
    %v2049 = vmul.f32 1.0, %v2048
    %v2050 = vrcp.pop %v2014
    %v2051 = vmul.f32 %v2014, %v2050
    %v2052 = vsub.f32 1.0, %v2051
    %v2053 = vmul.f32 %v2050, %v2052
    %v2054 = vadd.f32 %v2050, %v2053
    %vm2055 = vweird.f32 %v2014
    %vm2056 = vweird.f32 %v2050
    %vm2057 = vmor %vm2055, %vm2056
    %v2058 = vsel %vm2057, %v2050, %v2054
    %v2059 = vand.u32 2147483647, %v2014
    %vm2060 = vcmp.eq.f32.partialorder %v2059, 8.507059e+37
    %v2061 = vand.u32 %v2014, 2147483648
    %v2062 = vor.u32 1.1754944e-38, %v2061
    %v2063 = vsel %vm2060, %v2062, %v2058
    %v2064 = vmul.f32 1.0, %v2063
    %v2065 = vrcp.pop %v2015
    %v2066 = vmul.f32 %v2015, %v2065
    %v2067 = vsub.f32 1.0, %v2066
    %v2068 = vmul.f32 %v2065, %v2067
    %v2069 = vadd.f32 %v2065, %v2068
    %vm2070 = vweird.f32 %v2015
    %vm2071 = vweird.f32 %v2065
    %vm2072 = vmor %vm2070, %vm2071
    %v2073 = vsel %vm2072, %v2065, %v2069
    %v2074 = vand.u32 2147483647, %v2015
    %vm2075 = vcmp.eq.f32.partialorder %v2074, 8.507059e+37
    %v2076 = vand.u32 %v2015, 2147483648
    %v2077 = vor.u32 1.1754944e-38, %v2076
    %v2078 = vsel %vm2075, %v2077, %v2073
    %v2079 = vmul.f32 1.0, %v2078
    %v2080 = vrcp.pop %v2016
    %v2081 = vmul.f32 %v2016, %v2080
    %v2082 = vsub.f32 1.0, %v2081
    %v2083 = vmul.f32 %v2080, %v2082
    %v2084 = vadd.f32 %v2080, %v2083
    %vm2085 = vweird.f32 %v2016
    %vm2086 = vweird.f32 %v2080
    %vm2087 = vmor %vm2085, %vm2086
    %v2088 = vsel %vm2087, %v2080, %v2084
    %v2089 = vand.u32 2147483647, %v2016
    %vm2090 = vcmp.eq.f32.partialorder %v2089, 8.507059e+37
    %v2091 = vand.u32 %v2016, 2147483648
    %v2092 = vor.u32 1.1754944e-38, %v2091
    %v2093 = vsel %vm2090, %v2092, %v2088
    %v2094 = vmul.f32 1.0, %v2093
    %v2095 = vrcp.pop %v2017
    %v2096 = vmul.f32 %v2017, %v2095
    %v2097 = vsub.f32 1.0, %v2096
    %v2098 = vmul.f32 %v2095, %v2097
    %v2099 = vadd.f32 %v2095, %v2098
    %vm2100 = vweird.f32 %v2017
    %vm2101 = vweird.f32 %v2095
    %vm2102 = vmor %vm2100, %vm2101
    %v2103 = vsel %vm2102, %v2095, %v2099
    %v2104 = vand.u32 2147483647, %v2017
    %vm2105 = vcmp.eq.f32.partialorder %v2104, 8.507059e+37
    %v2106 = vand.u32 %v2017, 2147483648
    %v2107 = vor.u32 1.1754944e-38, %v2106
    %v2108 = vsel %vm2105, %v2107, %v2103
    %v2109 = vmul.f32 1.0, %v2108
    %v2110 = vrcp.pop %v2018
    %v2111 = vmul.f32 %v2018, %v2110
    %v2112 = vsub.f32 1.0, %v2111
    %v2113 = vmul.f32 %v2110, %v2112
    %v2114 = vadd.f32 %v2110, %v2113
    %vm2115 = vweird.f32 %v2018
    %vm2116 = vweird.f32 %v2110
    %vm2117 = vmor %vm2115, %vm2116
    %v2118 = vsel %vm2117, %v2110, %v2114
    %v2119 = vand.u32 2147483647, %v2018
    %vm2120 = vcmp.eq.f32.partialorder %v2119, 8.507059e+37
    %v2121 = vand.u32 %v2018, 2147483648
    %v2122 = vor.u32 1.1754944e-38, %v2121
    %v2123 = vsel %vm2120, %v2122, %v2118
    %v2124 = vmul.f32 1.0, %v2123
    %v2125 = vrcp.pop %v2019
    %v2126 = vmul.f32 %v2019, %v2125
    %v2127 = vsub.f32 1.0, %v2126
    %v2128 = vmul.f32 %v2125, %v2127
    %v2129 = vadd.f32 %v2125, %v2128
    %vm2130 = vweird.f32 %v2019
    %vm2131 = vweird.f32 %v2125
    %vm2132 = vmor %vm2130, %vm2131
    %v2133 = vsel %vm2132, %v2125, %v2129
    %v2134 = vand.u32 2147483647, %v2019
    %vm2135 = vcmp.eq.f32.partialorder %v2134, 8.507059e+37
    %v2136 = vand.u32 %v2019, 2147483648
    %v2137 = vor.u32 1.1754944e-38, %v2136
    %v2138 = vsel %vm2135, %v2137, %v2133
    %v2139 = vmul.f32 1.0, %v2138
    %2148 = vrot.lane.b32.xlu0 %v1965, 8
    %v2149 = vpop.permute.xlu0 %2148
    %2150 = vrot.lane.b32.xlu0 %v1968, 8
    %v2151 = vpop.permute.xlu0 %2150
    %2152 = vrot.lane.b32.xlu0 %v1971, 8
    %v2153 = vpop.permute.xlu0 %2152
    %2154 = vrot.lane.b32.xlu0 %v1974, 8
    %v2155 = vpop.permute.xlu0 %2154
    %2156 = vrot.lane.b32.xlu0 %v1977, 8
    %v2157 = vpop.permute.xlu0 %2156
    %2158 = vrot.lane.b32.xlu0 %v1980, 8
    %v2159 = vpop.permute.xlu0 %2158
    %2160 = vrot.lane.b32.xlu0 %v1983, 8
    %v2161 = vpop.permute.xlu0 %2160
    %2162 = vrot.lane.b32.xlu0 %v1986, 8
    %v2163 = vpop.permute.xlu0 %2162
    %v2172 = vmul.f32 %v2034, %v2149
    %v2173 = vmul.f32 %v2049, %v2151
    %v2174 = vmul.f32 %v2064, %v2153
    %v2175 = vmul.f32 %v2079, %v2155
    %v2176 = vmul.f32 %v2094, %v2157
    %v2177 = vmul.f32 %v2109, %v2159
    %v2178 = vmul.f32 %v2124, %v2161
    %v2179 = vmul.f32 %v2139, %v2163
    %2180 = vrot.lane.b32.xlu0 %v1475, 8
    %v2181 = vpop.permute.xlu0 %2180
    %2182 = vrot.lane.b32.xlu0 %v1476, 8
    %v2183 = vpop.permute.xlu0 %2182
    %2184 = vrot.lane.b32.xlu0 %v1477, 8
    %v2185 = vpop.permute.xlu0 %2184
    %2186 = vrot.lane.b32.xlu0 %v1478, 8
    %v2187 = vpop.permute.xlu0 %2186
    %2188 = vrot.lane.b32.xlu0 %v1507, 8
    %v2189 = vpop.permute.xlu0 %2188
    %2190 = vrot.lane.b32.xlu0 %v1508, 8
    %v2191 = vpop.permute.xlu0 %2190
    %2192 = vrot.lane.b32.xlu0 %v1509, 8
    %v2193 = vpop.permute.xlu0 %2192
    %2194 = vrot.lane.b32.xlu0 %v1510, 8
    %v2195 = vpop.permute.xlu0 %2194
    %v2204 = vadd.f32 %v2172, %v2181
    %v2205 = vadd.f32 %v2173, %v2183
    %v2206 = vadd.f32 %v2174, %v2185
    %v2207 = vadd.f32 %v2175, %v2187
    %v2208 = vadd.f32 %v2176, %v2189
    %v2209 = vadd.f32 %v2177, %v2191
    %v2210 = vadd.f32 %v2178, %v2193
    %v2211 = vadd.f32 %v2179, %v2195
    %v2212 = vld [vmem:[%s11] sm:$0xff]
    %v2213 = vld [vmem:[%s11 + $0x8] sm:$0xff]
    %v2214 = vld [vmem:[%s11 + $0x10] sm:$0xff]
    %v2215 = vld [vmem:[%s11 + $0x18] sm:$0xff]
    %2220 = vrot.lane.b32.xlu0 %v2212, 8
    %v2221 = vpop.permute.xlu0 %2220
    %2222 = vrot.lane.b32.xlu0 %v2213, 8
    %v2223 = vpop.permute.xlu0 %2222
    %2224 = vrot.lane.b32.xlu0 %v2214, 8
    %v2225 = vpop.permute.xlu0 %2224
    %2226 = vrot.lane.b32.xlu0 %v2215, 8
    %v2227 = vpop.permute.xlu0 %2226
    %v2232 = vmul.f32 %v2204, %v2221
    %v2233 = vmul.f32 %v2205, %v2223
    %v2234 = vmul.f32 %v2206, %v2225
    %v2235 = vmul.f32 %v2207, %v2227
    %v2236 = vmul.f32 %v2208, %v2221
    %v2237 = vmul.f32 %v2209, %v2223
    %v2238 = vmul.f32 %v2210, %v2225
    %v2239 = vmul.f32 %v2211, %v2227
    %2248 = vrot.lane.b32.xlu0 %v2232, 120
    %v2249 = vpop.permute.xlu0 %2248
    %2250 = vrot.lane.b32.xlu0 %v2233, 120
    %v2251 = vpop.permute.xlu0 %2250
    %2252 = vrot.lane.b32.xlu0 %v2234, 120
    %v2253 = vpop.permute.xlu0 %2252
    %2254 = vrot.lane.b32.xlu0 %v2235, 120
    %v2255 = vpop.permute.xlu0 %2254
    %2256 = vrot.lane.b32.xlu0 %v2236, 120
    %v2257 = vpop.permute.xlu0 %2256
    %2258 = vrot.lane.b32.xlu0 %v2237, 120
    %v2259 = vpop.permute.xlu0 %2258
    %2260 = vrot.lane.b32.xlu0 %v2238, 120
    %v2261 = vpop.permute.xlu0 %2260
    %2262 = vrot.lane.b32.xlu0 %v2239, 120
    %v2263 = vpop.permute.xlu0 %2262
    %v2272 = vsel %vm456, %v2249, 0.0
    %2273 = vadd.xlane.f32.xlu0 %v2272
    %v2274 = vpop.xlane.xlu0 %2273
    %v2275 = vsel %vm456, %v2251, 0.0
    %2276 = vadd.xlane.f32.xlu0 %v2275
    %v2277 = vpop.xlane.xlu0 %2276
    %v2278 = vsel %vm456, %v2253, 0.0
    %2279 = vadd.xlane.f32.xlu0 %v2278
    %v2280 = vpop.xlane.xlu0 %2279
    %v2281 = vsel %vm456, %v2255, 0.0
    %2282 = vadd.xlane.f32.xlu0 %v2281
    %v2283 = vpop.xlane.xlu0 %2282
    %v2284 = vsel %vm456, %v2257, 0.0
    %2285 = vadd.xlane.f32.xlu0 %v2284
    %v2286 = vpop.xlane.xlu0 %2285
    %v2287 = vsel %vm456, %v2259, 0.0
    %2288 = vadd.xlane.f32.xlu0 %v2287
    %v2289 = vpop.xlane.xlu0 %2288
    %v2290 = vsel %vm456, %v2261, 0.0
    %2291 = vadd.xlane.f32.xlu0 %v2290
    %v2292 = vpop.xlane.xlu0 %2291
    %v2293 = vsel %vm456, %v2263, 0.0
    %2294 = vadd.xlane.f32.xlu0 %v2293
    %v2295 = vpop.xlane.xlu0 %2294
    %v2304 = vlaneseq
    %v2305 = vand.u32 %v2304, 127
    %v2306 = vperm.slane %v2274, %v2305
    %v2307 = vadd.s32 %v2305, 4294967288
    %v2308 = vperm.slane %v2277, %v2307
    %vm2309 = vcmask 130112
    %v2310 = vsel %vm2309, %v2308, %v2306
    %v2311 = vadd.s32 %v2305, 4294967280
    %v2312 = vperm.slane %v2280, %v2311
    %vm2313 = vcmask 195712
    %v2314 = vsel %vm2313, %v2312, %v2310
    %v2315 = vadd.s32 %v2305, 4294967272
    %v2316 = vperm.slane %v2283, %v2315
    %vm2317 = vcmask 261312
    %v2318 = vsel %vm2317, %v2316, %v2314
    %v2319 = vperm.slane %v2286, %v2305
    %v2320 = vperm.slane %v2289, %v2307
    %v2321 = vsel %vm2309, %v2320, %v2319
    %v2322 = vperm.slane %v2292, %v2311
    %v2323 = vsel %vm2313, %v2322, %v2321
    %v2324 = vperm.slane %v2295, %v2315
    %v2325 = vsel %vm2317, %v2324, %v2323
    %vm2326 = vcmask 1041409
    %v2327 = vsel %vm2326, %v2325, %v2318
    %vm2329 = vcmask 254976
    %v2330 = vsel %vm2329, %v2327, 0.0
    %2331 = vadd.xlane.f32.xlu0 %v2330
    %v2332 = vpop.xlane.xlu0 %2331
    %v2333 = vld [vmem:[#allocation2] sm:$0x1]
    %2335 = vset.pattern.permute.xlu0 0
    %2336 = vperm.xlu0 %2335, %v2333
    %v2337 = vpop.permute.xlu0 %2336
    %v2339 = vperm.slane %v2337, 0
    %v2340 = vadd.f32 %v2332, %v2339
    %v2342 = vperm.slane %v2340, %v2305
    %vm2344 = vcmask 8192
    %2345 = vst.msk [vmem:[#allocation12] sm:$0x1] %vm2344, %v2342
    // Predicated region
    $region74: #{tpu_custom_call.1} parent=1 // pred_check
      _
    $region75: #{tpu_custom_call.1} parent=1 // pred_check_branch
      %2347 = sbr.rel (0) target = $region77
    $region76: #{tpu_custom_call.1} parent=1 // pred_region
      %2349 = vsyncadd [#allocation5], 0
      %s2351 = sshll.u32 [#allocation12], 4
      %s2352 = int_to_ptr.vmem [resolvable:$true] %s2351
      %s2353 = sshll.u32 %s13, 4
      %s2354 = int_to_ptr.hbm [resolvable:$true] %s2353
      %2356 = dma.vmem_to_hbm [thread:$0]  %s2352, 16, %s2354, [#allocation5]
    $region77: #{tpu_custom_call.1} parent=1 // pred_fallthru
      _
    // Predicated region
    $region78: #{tpu_custom_call.1} parent=1 // pred_check
      _
    $region79: #{tpu_custom_call.1} parent=1 // pred_check_branch
      %2358 = sbr.rel (0) target = $region81
    $region80: #{tpu_custom_call.1} parent=1 // pred_region
      %2360 = dma.done [#allocation5], 16
    $region81: #{tpu_custom_call.1} parent=1 // pred_fallthru
      _
    %2361 = vsyncpa [#allocation4], 1
    %2362 = vsyncpa [#allocation7], 1
    %2363 = vsyncpa [#allocation10], 1
    %2364 = vsyncpa [#allocation5], 1

</llo_original>
